<compile_context>
chip_gen: v7x
topology: tpu7x:2x2x1
jax: 0.10.0
libtpu: 0.0.40
codegen_flags: <defaults>
</compile_context>

<pallas_src>
import math
import numpy as np

import jax
import jax.numpy as jnp
from jax.experimental import pallas as pl
from jax.experimental.pallas import tpu as pltpu


# ----------------------------------------------------------------------------
# VMEM sizing helpers
# ----------------------------------------------------------------------------
def _round_up(v, m):
    return ((v + m - 1) // m) * m


def _vmem_capacity_bytes():
    try:
        info = pltpu.get_tpu_info()
        cap = getattr(info, "vmem_capacity_bytes", None)
        if cap:
            return int(cap)
    except Exception:
        pass
    return 64 * 1024 * 1024  # conservative default (v7x physical VMEM)


def _block_vmem_bytes(TB, N, C, num_heads, num_windows, x_itemsize, out_itemsize):
    """Approx. VMEM bytes for one grid step (padded to (8,128) tiles)."""
    hd = C // num_heads
    R = TB * N
    pad = lambda r, c, it: _round_up(max(r, 1), 8) * _round_up(max(c, 1), 128) * it
    b = 0
    b += 2 * pad(R, C, x_itemsize)                 # x block (double-buffered)
    b += 2 * pad(R, C, out_itemsize)               # out block
    b += 2 * pad(C, 3 * hd, 2)                     # per-head packed Wqkv (bf16)
    b += 2 * pad(hd, C, 2)                         # per-head Wproj (bf16)
    b += 2 * num_windows * pad(N, N, 4)            # per-head bias+mask (f32)
    b += 2 * pad(1, 3 * hd, 4) + 2 * pad(1, C, 4)  # biases
    b += pad(R, C, 4)                              # f32 output accumulator scratch
    # in-kernel intermediates (qkv, q/k/v, qn/kn, s, p, ctx), with slack
    interm = (pad(R, 3 * hd, 4) + 5 * pad(R, hd, 4)
              + 2 * TB * pad(N, N, 4) + TB * pad(N, N, 2) + pad(R, hd, 2))
    b += int(1.5 * interm)
    return b


def _choose_tb(Bw, num_windows, N, C, num_heads, x_itemsize, out_itemsize, budget):
    """TB = k * num_windows (k | batch): biggest window block that fits VMEM.

    TB must stay a multiple of num_windows so the (bias + shift-mask) tiling
    stays aligned with window classes (flat index % num_windows).  Prefer >=2
    steps along the window grid axis (v7x has 2 TensorCores) as long as the
    GEMM M dim stays >= 128 rows.
    """
    B = Bw // num_windows

    def fits(k):
        return _block_vmem_bytes(k * num_windows, N, C, num_heads, num_windows,
                                 x_itemsize, out_itemsize) <= budget

    feasible = [k for k in range(1, B + 1) if B % k == 0 and fits(k)]
    if not feasible:
        feasible = [1]
    k = max(feasible)
    if k == B and B > 1:
        alts = [d for d in feasible if d < B and d * num_windows * N >= 128]
        if alts:
            k = max(alts)
    return k * num_windows


# ----------------------------------------------------------------------------
# Pallas kernel: one head x one block of windows per grid step
# ----------------------------------------------------------------------------
def _make_window_attn_kernel(TB, N, C, num_heads, num_windows):
    hd = C // num_heads
    k_rep = TB // num_windows
    R = TB * N

    def kernel(x_ref, wqkv_ref, bqkv_ref, wproj_ref, bproj_ref, bm_ref,
               scale_ref, o_ref, acc_ref):
        h = pl.program_id(1)

        @pl.when(h == 0)
        def _():
            acc_ref[...] = jnp.zeros_like(acc_ref)

        x = x_ref[...]                                       # (R, C) bf16

        # Fused per-head QKV projection: one MXU GEMM, f32 accumulation.
        qkv = jnp.dot(x, wqkv_ref[0],
                      preferred_element_type=jnp.float32) + bqkv_ref[0]

        q = qkv[:, 0:hd]
        k = qkv[:, hd:2 * hd]
        v = qkv[:, 2 * hd:3 * hd]

        # F.normalize(., dim=-1, eps=1e-12) == x * rsqrt(max(sum(x^2), 1e-24)).
        # The clamped/exp'd logit scale is folded into qn (cheaper than scaling s).
        qn = q * (jax.lax.rsqrt(jnp.maximum(jnp.sum(q * q, -1, keepdims=True),
                                            1e-24)) * scale_ref[h])
        kn = k * jax.lax.rsqrt(jnp.maximum(jnp.sum(k * k, -1, keepdims=True),
                                           1e-24))

        qn3 = qn.astype(jnp.bfloat16).reshape(TB, N, hd)
        kn3 = kn.astype(jnp.bfloat16).reshape(TB, N, hd)
        v3 = v.astype(jnp.bfloat16).reshape(TB, N, hd)

        # Cosine attention logits (batched over TB windows), f32 accumulation.
        s = jnp.einsum('tnd,tmd->tnm', qn3, kn3,
                       preferred_element_type=jnp.float32)

        # Rel-pos bias + shift mask, broadcast over the k_rep window groups
        # (window class = flat index % num_windows); no concat/copy.
        s = (s.reshape(k_rep, num_windows, N, N)
             + bm_ref[0][None]).reshape(TB, N, N)

        # Softmax along the last axis (reciprocal on the EUP).
        m = jnp.max(s, -1, keepdims=True)
        p = jnp.exp(s - m)
        p = p * pl.reciprocal(jnp.sum(p, -1, keepdims=True), approx=True)

        ctx = jnp.einsum('tnm,tmd->tnd', p.astype(jnp.bfloat16), v3,
                         preferred_element_type=jnp.float32)   # (TB, N, hd)

        # Per-head output-projection accumulation into the persistent f32 scratch.
        acc_ref[...] += jnp.dot(ctx.reshape(R, hd).astype(jnp.bfloat16),
                                wproj_ref[0],
                                preferred_element_type=jnp.float32)

        @pl.when(h == num_heads - 1)
        def _():
            o_ref[...] = (acc_ref[...] + bproj_ref[...]).astype(o_ref.dtype)

    return kernel


def window_attention_pallas(xw, wqkv_hm, bqkv_hm, wproj_hm, bproj,
                            scale, bm, num_heads, num_windows, out_dtype):
    Bw, N, C = xw.shape
    hd = C // num_heads

    capacity = _vmem_capacity_bytes()
    budget = int(0.4 * capacity)
    TB = _choose_tb(Bw, num_windows, N, C, num_heads,
                    jnp.dtype(jnp.bfloat16).itemsize,
                    jnp.dtype(out_dtype).itemsize, budget)
    assert TB % num_windows == 0 and Bw % TB == 0, (
        "bias+mask tiling requires TB to be a multiple of num_windows and to "
        "divide the total window count")
    R = TB * N

    kernel = _make_window_attn_kernel(TB, N, C, num_heads, num_windows)
    xw_flat = xw.reshape(Bw * N, C).astype(jnp.bfloat16)

    out = pl.pallas_call(
        kernel,
        out_shape=jax.ShapeDtypeStruct((Bw * N, C), out_dtype),
        grid=(Bw // TB, num_heads),
        in_specs=[
            pl.BlockSpec((R, C), lambda i, h: (i, 0)),                # x rows (bf16)
            pl.BlockSpec((1, C, 3 * hd), lambda i, h: (h, 0, 0)),     # per-head Wqkv
            pl.BlockSpec((1, 1, 3 * hd), lambda i, h: (h, 0, 0)),     # per-head qkv bias
            pl.BlockSpec((1, hd, C), lambda i, h: (h, 0, 0)),         # per-head Wproj
            pl.BlockSpec((1, C), lambda i, h: (0, 0)),                # proj bias
            pl.BlockSpec((1, num_windows, N, N),
                         lambda i, h: (h, 0, 0, 0)),                  # bias + shift mask
            pl.BlockSpec(memory_space=pltpu.MemorySpace.SMEM),        # logit scale (H,)
        ],
        out_specs=pl.BlockSpec((R, C), lambda i, h: (i, 0)),
        scratch_shapes=[pltpu.VMEM((R, C), jnp.float32)],
        compiler_params=pltpu.CompilerParams(
            dimension_semantics=("parallel", "arbitrary"),
            vmem_limit_bytes=int(0.75 * capacity)),
    )(xw_flat, wqkv_hm, bqkv_hm, wproj_hm, bproj, bm, scale)
    return out.reshape(Bw, N, C)


# ----------------------------------------------------------------------------
# Pure-JAX reference for the windowed attention stage (correctness check)
# ----------------------------------------------------------------------------
def window_attention_ref(xw, wqkv_t, bqkv, wproj_t, bproj,
                         scale, rpb, mask, num_heads):
    Bw, N, C = xw.shape
    hd = C // num_heads
    nWm = mask.shape[0]
    qkv = xw @ wqkv_t + bqkv
    qkv = qkv.reshape(Bw, N, 3, num_heads, hd).transpose(2, 0, 3, 1, 4)
    q, k, v = qkv[0], qkv[1], qkv[2]
    qn = q / jnp.maximum(jnp.sqrt(jnp.sum(q * q, -1, keepdims=True)), 1e-12)
    kn = k / jnp.maximum(jnp.sqrt(jnp.sum(k * k, -1, keepdims=True)), 1e-12)
    attn = jnp.einsum('bhnd,bhmd->bhnm', qn, kn) * scale[None, :, None, None]
    attn = attn + rpb[None]
    mask_t = jnp.tile(mask, (Bw // nWm, 1, 1))
    attn = attn + mask_t[:, None]
    attn = jax.nn.softmax(attn, axis=-1)
    out = jnp.einsum('bhnm,bhmd->bhnd', attn, v)
    out = out.transpose(0, 2, 1, 3).reshape(Bw, N, C)
    return out @ wproj_t + bproj


# ----------------------------------------------------------------------------
# Parameter setup (deterministic) and V2 relative-position bias (glue)
# ----------------------------------------------------------------------------
def init_params(key, dim, num_heads):
    ks = jax.random.split(key, 7)
    qkv_b = 0.02 * jax.random.normal(ks[1], (3 * dim,), jnp.float32)
    qkv_b = qkv_b.at[dim:2 * dim].set(0.0)   # V2 zeroes the key bias
    return {
        'qkv_w': 0.02 * jax.random.normal(ks[0], (3 * dim, dim), jnp.float32),
        'qkv_b': qkv_b,
        'proj_w': 0.02 * jax.random.normal(ks[2], (dim, dim), jnp.float32),
        'proj_b': 0.02 * jax.random.normal(ks[3], (dim,), jnp.float32),
        'logit_scale': jnp.log(10.0 * jnp.ones((num_heads, 1, 1), jnp.float32)),
        'cpb_w1': 0.02 * jax.random.normal(ks[4], (512, 2), jnp.float32),
        'cpb_b1': 0.02 * jax.random.normal(ks[5], (512,), jnp.float32),
        'cpb_w2': 0.02 * jax.random.normal(ks[6], (num_heads, 512), jnp.float32),
    }


def compute_rel_pos_bias(params, window_size, num_heads):
    ws0, ws1 = window_size
    N = ws0 * ws1
    # relative coords table (static)
    rch = np.arange(-(ws0 - 1), ws0, dtype=np.float32)
    rcw = np.arange(-(ws1 - 1), ws1, dtype=np.float32)
    table = np.stack(np.meshgrid(rch, rcw, indexing='ij'))
    table = np.transpose(table, (1, 2, 0)).astype(np.float32)
    table[..., 0] /= max(ws0 - 1, 1)
    table[..., 1] /= max(ws1 - 1, 1)
    table *= 8.0
    table = np.sign(table) * np.log2(np.abs(table) + 1.0) / 3.0
    table = jnp.asarray(table.reshape(-1, 2))
    # relative position index (static)
    coords = np.stack(np.meshgrid(np.arange(ws0), np.arange(ws1), indexing='ij'))
    cf = coords.reshape(2, -1)
    rel = (cf[:, :, None] - cf[:, None, :]).transpose(1, 2, 0)
    rel[..., 0] += ws0 - 1
    rel[..., 1] += ws1 - 1
    rel[..., 0] *= 2 * ws1 - 1
    idx = rel.sum(-1).reshape(-1)
    # cpb MLP:  2 -> 512 -> ReLU -> num_heads (no bias)
    h = jnp.maximum(table @ params['cpb_w1'].T + params['cpb_b1'], 0.0)
    btab = h @ params['cpb_w2'].T                      # (T, num_heads)
    rpb = btab[idx].reshape(N, N, num_heads).transpose(2, 0, 1)
    return 16.0 * jax.nn.sigmoid(rpb)                  # (num_heads, N, N)


def build_attn_mask(pad_H, pad_W, window_size, shift, num_windows, N):
    if sum(shift) == 0:
        return jnp.zeros((num_windows, N, N), jnp.float32)
    ws0, ws1 = window_size
    m = np.zeros((pad_H, pad_W), dtype=np.float32)
    h_slices = ((0, -ws0), (-ws0, -shift[0]), (-shift[0], None))
    w_slices = ((0, -ws1), (-ws1, -shift[1]), (-shift[1], None))
    cnt = 0
    for hs in h_slices:
        for wsl in w_slices:
            m[hs[0]:hs[1], wsl[0]:wsl[1]] = cnt
            cnt += 1
    m = m.reshape(pad_H // ws0, ws0, pad_W // ws1, ws1)
    m = m.transpose(0, 2, 1, 3).reshape(num_windows, N)
    diff = m[:, None, :] - m[:, :, None]
    return jnp.asarray(np.where(diff != 0, -100.0, 0.0).astype(np.float32))


# ----------------------------------------------------------------------------
# Full forward (glue + kernel)
# ----------------------------------------------------------------------------
def shifted_window_attention_v2(x, params, window_size, shift_size, num_heads,
                                impl="pallas"):
    B, H, W, C = x.shape
    ws0, ws1 = window_size
    pad_r = (ws1 - W % ws1) % ws1
    pad_b = (ws0 - H % ws0) % ws0
    xp = jnp.pad(x, ((0, 0), (0, pad_b), (0, pad_r), (0, 0)))
    pad_H, pad_W = H + pad_b, W + pad_r

    shift = list(shift_size)
    if ws0 >= pad_H:
        shift[0] = 0
    if ws1 >= pad_W:
        shift[1] = 0
    if sum(shift) > 0:
        xp = jnp.roll(xp, shift=(-shift[0], -shift[1]), axis=(1, 2))

    nH, nW = pad_H // ws0, pad_W // ws1
    num_windows = nH * nW
    N = ws0 * ws1
    # xw flattened index = b*num_windows + window_class  (window index fastest);
    # the kernel relies on this ordering for the bias+mask tiling.
    xw = xp.reshape(B, nH, ws0, nW, ws1, C).transpose(0, 1, 3, 2, 4, 5)
    xw = xw.reshape(B * num_windows, N, C)

    rpb = compute_rel_pos_bias(params, window_size, num_heads)
    scale = jnp.exp(jnp.minimum(params['logit_scale'].reshape(-1),
                                math.log(100.0))).astype(jnp.float32)
    mask = build_attn_mask(pad_H, pad_W, window_size, shift, num_windows, N)

    wqkv_t = params['qkv_w'].T                       # (C, 3C)
    bqkv = params['qkv_b'].at[C:2 * C].set(0.0)      # forward also zeroes key bias
    wproj_t = params['proj_w'].T                     # (C, C)
    bproj = params['proj_b']

    if impl == "pallas":
        hd = C // num_heads
        # Head-major weight layouts (done once, outside the kernel), bf16 MXU operands.
        wqkv_hm = (wqkv_t.reshape(C, 3, num_heads, hd).transpose(2, 0, 1, 3)
                   .reshape(num_heads, C, 3 * hd).astype(jnp.bfloat16))
        bqkv_hm = (bqkv.reshape(3, num_heads, hd).transpose(1, 0, 2)
                   .reshape(num_heads, 1, 3 * hd))
        wproj_hm = wproj_t.reshape(num_heads, hd, C).astype(jnp.bfloat16)
        bm = rpb[:, None, :, :] + mask[None, :, :, :]   # (H, nW, N, N) bias + shift mask
        out_w = window_attention_pallas(xw, wqkv_hm, bqkv_hm, wproj_hm,
                                        bproj[None, :], scale, bm,
                                        num_heads, num_windows, x.dtype)
    else:
        out_w = window_attention_ref(xw, wqkv_t, bqkv, wproj_t, bproj,
                                     scale, rpb, mask, num_heads)

    out = out_w.reshape(B, nH, nW, ws0, ws1, C).transpose(0, 1, 3, 2, 4, 5)
    out = out.reshape(B, pad_H, pad_W, C)
    if sum(shift) > 0:
        out = jnp.roll(out, shift=(shift[0], shift[1]), axis=(1, 2))
    return out[:, :H, :W, :]
    # TODO(synk): attention_dropout / dropout are identity at p=0.0 (module default); not implemented.


# ----------------------------------------------------------------------------
if __name__ == "__main__":
    dim = 32
    num_heads = 4
    window_size = [4, 4]
    shift_size = [2, 2]
    B, H, W = 2, 8, 8

    key = jax.random.PRNGKey(0)
    k_param, k_x = jax.random.split(key)
    params = init_params(k_param, dim, num_heads)
    x = jax.random.normal(k_x, (B, H, W, dim), jnp.float32)

    out = shifted_window_attention_v2(x, params, window_size, shift_size,
                                      num_heads, impl="pallas")
    out = jax.block_until_ready(out)

    ref = shifted_window_attention_v2(x, params, window_size, shift_size,
                                      num_heads, impl="ref")
    ref = jax.block_until_ready(ref)

    assert out.shape == (B, H, W, dim)
    # Tolerance relaxed vs the exact-f32 reference: the kernel runs the GEMMs with
    # bf16 MXU operands (f32 accumulation) and uses the EUP approximate reciprocal
    # for the softmax denominator.
    assert np.allclose(np.asarray(out), np.asarray(ref), rtol=2e-2, atol=2e-2)
    print("KERNEL_OK")
</pallas_src>

<mosaic_0001>
module attributes {stable_mosaic.version = 11 : i64} {
  func.func @kernel(%arg0: i32, %arg1: i32, %arg2: memref<128x32xbf16, #tpu.memory_space<vmem>>, %arg3: memref<1x32x24xbf16, #tpu.memory_space<vmem>>, %arg4: memref<1x1x24xf32, #tpu.memory_space<vmem>>, %arg5: memref<1x8x32xbf16, #tpu.memory_space<vmem>>, %arg6: memref<1x32xf32, #tpu.memory_space<vmem>>, %arg7: memref<1x4x16x16xf32, #tpu.memory_space<vmem>>, %arg8: memref<4xf32, #tpu.memory_space<smem>>, %arg9: memref<128x32xf32, #tpu.memory_space<vmem>>, %arg10: memref<128x32xf32, #tpu.memory_space<vmem>>) attributes {dimension_semantics = [#tpu.dimension_semantics<parallel>, #tpu.dimension_semantics<arbitrary>], iteration_bounds = array<i64: 1, 4>, scalar_prefetch = 0 : i64, scratch_operands = 1 : i64, tpu.core_type = #tpu.core_type<tc>, window_params = [{transform_indices = @transform_0, window_bounds = array<i64: 128, 32>}, {transform_indices = @transform_1, window_bounds = array<i64: 1, 32, 24>}, {transform_indices = @transform_2, window_bounds = array<i64: 1, 1, 24>}, {transform_indices = @transform_3, window_bounds = array<i64: 1, 8, 32>}, {pipeline_mode = #tpu.pipeline_mode<synchronous>, transform_indices = @transform_4, window_bounds = array<i64: 1, 32>}, {transform_indices = @transform_5, window_bounds = array<i64: 1, 4, 16, 16>}, {transform_indices = @transform_6, window_bounds = array<i64: 4>}, {transform_indices = @transform_7, window_bounds = array<i64: 128, 32>}]} {
    %c0_i32 = arith.constant 0 : i32
    %0 = arith.cmpi eq, %arg1, %c0_i32 : i32
    %1 = arith.extui %0 : i1 to i32
    %c0_i32_0 = arith.constant 0 : i32
    %2 = arith.cmpi ne, %1, %c0_i32_0 : i32
    scf.if %2 {
      %cst_29 = arith.constant 0.000000e+00 : f32
      %71 = vector.broadcast %cst_29 : f32 to vector<128x32xf32>
      %c0_30 = arith.constant 0 : index
      %c0_31 = arith.constant 0 : index
      %72 = vector.load %arg10[%c0_30, %c0_31] : memref<128x32xf32, #tpu.memory_space<vmem>>, vector<128x32xf32>
      tpu.vector_store %arg10[%c0_30, %c0_31], %71 {strides = array<i32>} : memref<128x32xf32, #tpu.memory_space<vmem>>, vector<128x32xf32>,
    } else {
    }
    %c0 = arith.constant 0 : index
    %c0_1 = arith.constant 0 : index
    %3 = vector.load %arg2[%c0, %c0_1] : memref<128x32xbf16, #tpu.memory_space<vmem>>, vector<128x32xbf16>
    %c0_2 = arith.constant 0 : index
    %c0_3 = arith.constant 0 : index
    %c0_4 = arith.constant 0 : index
    %4 = vector.load %arg3[%c0_2, %c0_3, %c0_4] : memref<1x32x24xbf16, #tpu.memory_space<vmem>>, vector<1x32x24xbf16>
    %5 = vector.shape_cast %4 : vector<1x32x24xbf16> to vector<32x24xbf16>
    %cst = arith.constant dense<0.000000e+00> : vector<128x24xf32>
    %6 = tpu.matmul %3, %5, %cst {dimension_numbers = #tpu.dot_dimension_numbers<[1], [0], [0], [1], [0, 0, 1, 1], [], []>} : vector<128x32xbf16>, vector<32x24xbf16>, vector<128x24xf32> -> vector<128x24xf32>
    %c0_5 = arith.constant 0 : index
    %c0_6 = arith.constant 0 : index
    %c0_7 = arith.constant 0 : index
    %7 = vector.load %arg4[%c0_5, %c0_6, %c0_7] : memref<1x1x24xf32, #tpu.memory_space<vmem>>, vector<1x1x24xf32>
    %8 = vector.shape_cast %7 : vector<1x1x24xf32> to vector<1x24xf32>
    %9 = vector.broadcast %8 : vector<1x24xf32> to vector<128x24xf32>
    %10 = arith.addf %6, %9 : vector<128x24xf32>
    %11 = vector.extract_strided_slice %10 {offsets = [0, 0], sizes = [128, 8], strides = [1, 1]} : vector<128x24xf32> to vector<128x8xf32>
    %12 = vector.extract_strided_slice %10 {offsets = [0, 8], sizes = [128, 8], strides = [1, 1]} : vector<128x24xf32> to vector<128x8xf32>
    %13 = vector.extract_strided_slice %10 {offsets = [0, 16], sizes = [128, 8], strides = [1, 1]} : vector<128x24xf32> to vector<128x8xf32>
    %14 = arith.mulf %11, %11 : vector<128x8xf32>
    %cst_8 = arith.constant dense<0.000000e+00> : vector<128xf32>
    %15 = vector.multi_reduction <add>, %14, %cst_8 [1] : vector<128x8xf32> to vector<128xf32>
    %16 = vector.shape_cast %15 : vector<128xf32> to vector<128x1xf32>
    %cst_9 = arith.constant 1.000000e-24 : f32
    %17 = vector.broadcast %cst_9 : f32 to vector<128x1xf32>
    %18 = arith.maximumf %16, %17 : vector<128x1xf32>
    %19 = math.rsqrt %18 : vector<128x1xf32>
    %20 = arith.index_cast %arg1 : i32 to index
    %21 = memref.load %arg8[%20] : memref<4xf32, #tpu.memory_space<smem>>
    %22 = vector.broadcast %21 : f32 to vector<128x1xf32>
    %23 = arith.mulf %19, %22 : vector<128x1xf32>
    %24 = vector.broadcast %23 : vector<128x1xf32> to vector<128x8xf32>
    %25 = arith.mulf %11, %24 : vector<128x8xf32>
    %26 = arith.mulf %12, %12 : vector<128x8xf32>
    %cst_10 = arith.constant dense<0.000000e+00> : vector<128xf32>
    %27 = vector.multi_reduction <add>, %26, %cst_10 [1] : vector<128x8xf32> to vector<128xf32>
    %28 = vector.shape_cast %27 : vector<128xf32> to vector<128x1xf32>
    %cst_11 = arith.constant 1.000000e-24 : f32
    %29 = vector.broadcast %cst_11 : f32 to vector<128x1xf32>
    %30 = arith.maximumf %28, %29 : vector<128x1xf32>
    %31 = math.rsqrt %30 : vector<128x1xf32>
    %32 = vector.broadcast %31 : vector<128x1xf32> to vector<128x8xf32>
    %33 = arith.mulf %12, %32 : vector<128x8xf32>
    %34 = arith.truncf %25 : vector<128x8xf32> to vector<128x8xbf16>
    %35 = vector.shape_cast %34 : vector<128x8xbf16> to vector<8x16x8xbf16>
    %36 = arith.truncf %33 : vector<128x8xf32> to vector<128x8xbf16>
    %37 = vector.shape_cast %36 : vector<128x8xbf16> to vector<8x16x8xbf16>
    %38 = arith.truncf %13 : vector<128x8xf32> to vector<128x8xbf16>
    %39 = vector.shape_cast %38 : vector<128x8xbf16> to vector<8x16x8xbf16>
    "tpu.trace_start"() <{level = 10 : i32, message = "tnd,tmd->tnm"}> : () -> ()
    %cst_12 = arith.constant dense<0.000000e+00> : vector<8x16x16xf32>
    %40 = tpu.matmul %35, %37, %cst_12 {dimension_numbers = #tpu.dot_dimension_numbers<[2], [2], [1], [1], [0, 0, 0, 1, 1, 1], [0], [0]>} : vector<8x16x8xbf16>, vector<8x16x8xbf16>, vector<8x16x16xf32> -> vector<8x16x16xf32>
    "tpu.trace_stop"() : () -> ()
    %41 = vector.shape_cast %40 : vector<8x16x16xf32> to vector<2x4x16x16xf32>
    %c0_13 = arith.constant 0 : index
    %c0_14 = arith.constant 0 : index
    %c0_15 = arith.constant 0 : index
    %c0_16 = arith.constant 0 : index
    %42 = vector.load %arg7[%c0_13, %c0_14, %c0_15, %c0_16] : memref<1x4x16x16xf32, #tpu.memory_space<vmem>>, vector<1x4x16x16xf32>
    %43 = vector.shape_cast %42 : vector<1x4x16x16xf32> to vector<4x16x16xf32>
    %44 = vector.shape_cast %43 : vector<4x16x16xf32> to vector<1x4x16x16xf32>
    %45 = vector.broadcast %44 : vector<1x4x16x16xf32> to vector<2x4x16x16xf32>
    %46 = arith.addf %41, %45 : vector<2x4x16x16xf32>
    %47 = vector.shape_cast %46 : vector<2x4x16x16xf32> to vector<8x16x16xf32>
    %cst_17 = arith.constant dense<0xFF800000> : vector<8x16xf32>
    %48 = vector.multi_reduction <maximumf>, %47, %cst_17 [2] : vector<8x16x16xf32> to vector<8x16xf32>
    %49 = vector.shape_cast %48 : vector<8x16xf32> to vector<8x16x1xf32>
    %50 = vector.broadcast %49 : vector<8x16x1xf32> to vector<8x16x16xf32>
    %51 = arith.subf %47, %50 : vector<8x16x16xf32>
    %52 = math.exp %51 : vector<8x16x16xf32>
    %cst_18 = arith.constant dense<0.000000e+00> : vector<8x16xf32>
    %53 = vector.multi_reduction <add>, %52, %cst_18 [2] : vector<8x16x16xf32> to vector<8x16xf32>
    %54 = vector.shape_cast %53 : vector<8x16xf32> to vector<8x16x1xf32>
    %55 = tpu.reciprocal %54 {approx = true} : vector<8x16x1xf32> -> vector<8x16x1xf32>
    %56 = vector.broadcast %55 : vector<8x16x1xf32> to vector<8x16x16xf32>
    %57 = arith.mulf %52, %56 : vector<8x16x16xf32>
    %58 = arith.truncf %57 : vector<8x16x16xf32> to vector<8x16x16xbf16>
    "tpu.trace_start"() <{level = 10 : i32, message = "tnm,tmd->tnd"}> : () -> ()
    %cst_19 = arith.constant dense<0.000000e+00> : vector<8x16x8xf32>
    %59 = tpu.matmul %58, %39, %cst_19 {dimension_numbers = #tpu.dot_dimension_numbers<[2], [1], [1], [2], [0, 0, 0, 1, 1, 2], [0], [0]>} : vector<8x16x16xbf16>, vector<8x16x8xbf16>, vector<8x16x8xf32> -> vector<8x16x8xf32>
    "tpu.trace_stop"() : () -> ()
    %c0_20 = arith.constant 0 : index
    %c0_21 = arith.constant 0 : index
    %60 = vector.load %arg10[%c0_20, %c0_21] : memref<128x32xf32, #tpu.memory_space<vmem>>, vector<128x32xf32>
    %61 = vector.shape_cast %59 : vector<8x16x8xf32> to vector<128x8xf32>
    %62 = arith.truncf %61 : vector<128x8xf32> to vector<128x8xbf16>
    %c0_22 = arith.constant 0 : index
    %c0_23 = arith.constant 0 : index
    %c0_24 = arith.constant 0 : index
    %63 = vector.load %arg5[%c0_22, %c0_23, %c0_24] : memref<1x8x32xbf16, #tpu.memory_space<vmem>>, vector<1x8x32xbf16>
    %64 = vector.shape_cast %63 : vector<1x8x32xbf16> to vector<8x32xbf16>
    %cst_25 = arith.constant dense<0.000000e+00> : vector<128x32xf32>
    %65 = tpu.matmul %62, %64, %cst_25 {dimension_numbers = #tpu.dot_dimension_numbers<[1], [0], [0], [1], [0, 0, 1, 1], [], []>} : vector<128x8xbf16>, vector<8x32xbf16>, vector<128x32xf32> -> vector<128x32xf32>
    %66 = arith.addf %60, %65 : vector<128x32xf32>
    %c0_26 = arith.constant 0 : index
    %c0_27 = arith.constant 0 : index
    %67 = vector.load %arg10[%c0_26, %c0_27] : memref<128x32xf32, #tpu.memory_space<vmem>>, vector<128x32xf32>
    tpu.vector_store %arg10[%c0_26, %c0_27], %66 {strides = array<i32>} : memref<128x32xf32, #tpu.memory_space<vmem>>, vector<128x32xf32>,
    %c3_i32 = arith.constant 3 : i32
    %68 = arith.cmpi eq, %arg1, %c3_i32 : i32
    %69 = arith.extui %68 : i1 to i32
    %c0_i32_28 = arith.constant 0 : i32
    %70 = arith.cmpi ne, %69, %c0_i32_28 : i32
    scf.if %70 {
      %c0_29 = arith.constant 0 : index
      %c0_30 = arith.constant 0 : index
      %71 = vector.load %arg10[%c0_29, %c0_30] : memref<128x32xf32, #tpu.memory_space<vmem>>, vector<128x32xf32>
      %c0_31 = arith.constant 0 : index
      %c0_32 = arith.constant 0 : index
      %72 = vector.load %arg6[%c0_31, %c0_32] : memref<1x32xf32, #tpu.memory_space<vmem>>, vector<1x32xf32>
      %73 = vector.broadcast %72 : vector<1x32xf32> to vector<128x32xf32>
      %74 = arith.addf %71, %73 : vector<128x32xf32>
      %c0_33 = arith.constant 0 : index
      %c0_34 = arith.constant 0 : index
      %75 = vector.load %arg9[%c0_33, %c0_34] : memref<128x32xf32, #tpu.memory_space<vmem>>, vector<128x32xf32>
      tpu.vector_store %arg9[%c0_33, %c0_34], %74 {strides = array<i32>} : memref<128x32xf32, #tpu.memory_space<vmem>>, vector<128x32xf32>,
    } else {
    }
    return
  }
  func.func @transform_0(%arg0: i32, %arg1: i32) -> (i32, i32) {
    %c0_i32 = arith.constant 0 : i32
    %c0_i32_0 = arith.constant 0 : i32
    return %arg0, %c0_i32 : i32, i32
  }
  func.func @transform_1(%arg0: i32, %arg1: i32) -> (i32, i32, i32) {
    %c0_i32 = arith.constant 0 : i32
    %c0_i32_0 = arith.constant 0 : i32
    %c0_i32_1 = arith.constant 0 : i32
    return %arg1, %c0_i32, %c0_i32_0 : i32, i32, i32
  }
  func.func @transform_2(%arg0: i32, %arg1: i32) -> (i32, i32, i32) {
    %c0_i32 = arith.constant 0 : i32
    %c0_i32_0 = arith.constant 0 : i32
    %c0_i32_1 = arith.constant 0 : i32
    return %arg1, %c0_i32, %c0_i32_0 : i32, i32, i32
  }
  func.func @transform_3(%arg0: i32, %arg1: i32) -> (i32, i32, i32) {
    %c0_i32 = arith.constant 0 : i32
    %c0_i32_0 = arith.constant 0 : i32
    %c0_i32_1 = arith.constant 0 : i32
    return %arg1, %c0_i32, %c0_i32_0 : i32, i32, i32
  }
  func.func @transform_4(%arg0: i32, %arg1: i32) -> (i32, i32) {
    %c0_i32 = arith.constant 0 : i32
    %c0_i32_0 = arith.constant 0 : i32
    %c0_i32_1 = arith.constant 0 : i32
    return %c0_i32, %c0_i32_0 : i32, i32
  }
  func.func @transform_5(%arg0: i32, %arg1: i32) -> (i32, i32, i32, i32) {
    %c0_i32 = arith.constant 0 : i32
    %c0_i32_0 = arith.constant 0 : i32
    %c0_i32_1 = arith.constant 0 : i32
    %c0_i32_2 = arith.constant 0 : i32
    return %arg1, %c0_i32, %c0_i32_0, %c0_i32_1 : i32, i32, i32, i32
  }
  func.func @transform_6(%arg0: i32, %arg1: i32) -> i32 {
    %c0_i32 = arith.constant 0 : i32
    %c0_i32_0 = arith.constant 0 : i32
    return %c0_i32 : i32
  }
  func.func @transform_7(%arg0: i32, %arg1: i32) -> (i32, i32) {
    %c0_i32 = arith.constant 0 : i32
    %c0_i32_0 = arith.constant 0 : i32
    return %arg0, %c0_i32 : i32, i32
  }
}

</mosaic_0001>

<llo_original>
// kernel: tpu_custom_call.1
$region0: #{tpu_custom_call.1}
  #allocation0 [shape = 'u32[]', space=smem, size = 0x4, offset = 0x4, fixed_abs, tag = 'smem constant byte address 0x4 - core index']
  #allocation1 [shape = 'u32[144,128]{1,0:T(1,128)}', space=vmem, size = 0x12000, scoped, tag = 'internal scratch']
  #allocation2 [shape = 'f32[128,32]{1,0:T(8,128)}', space=vmem, size = 0x10000, scoped, tag = 'scratch operand']
  %s0 = inlined_call_operand.vmem [shape: bf16[128,32], index: 0, kind: input, shape index: {}]
  %s1 = inlined_call_operand.vmem [shape: bf16[4,32,24], index: 1, kind: input, shape index: {}]
  %s2 = inlined_call_operand.vmem [shape: f32[4,1,24], index: 2, kind: input, shape index: {}]
  %s3 = inlined_call_operand.vmem [shape: bf16[4,8,32], index: 3, kind: input, shape index: {}]
  %s4 = inlined_call_operand.vmem [shape: f32[1,32], index: 4, kind: input, shape index: {}]
  %s5 = inlined_call_operand.hbm [shape: f32[4,4,16,16], index: 5, kind: input, shape index: {}]
  %s6 = inlined_call_operand.vmem [shape: f32[4], index: 6, kind: input, shape index: {}]
  %s7 = inlined_call_operand.vmem [shape: f32[128,32], index: 7, kind: output, shape index: {}]
  %s8 = sld [smem:[#allocation0]]
  $region77: #{tpu_custom_call.1} parent=0
    _
  %s10 = ssub.s32 1, %s8
  %s11 = scalar_select 0, %s10, %s8
  $region1: #{tpu_custom_call.1} parent=0
    #allocation3 [shape = 'u8[65536]{0}', space=vmem, size = 0x10000, scoped, tag = 'input window, operand 5']
    #allocation4 [shape = 's32[2]{0}', space=sflag, size = 0x8, scoped, tag = 'scoped memory for tpu_custom_call.1']
    #allocation5 [shape = 's32[2]{0}', space=sflag, size = 0x8, scoped, tag = 'scoped memory for tpu_custom_call.1']
    #allocation6 [shape = 'u8[512]{0}', space=smem, size = 0x200, scoped, tag = 'input window, operand 6, single buffered']
    %12 = vsyncpa [#allocation4], 0
    %s13 = scalar_lea.sflag [#allocation4], 1
    %14 = vsyncpa %s13, 0
    %15 = vsyncpa [#allocation5], 0
    loop: start=0, step=1, limit=6
    $region2: #{tpu_custom_call.1} parent=1 // loop_pre_header
      _
    $region3: #{tpu_custom_call.1} parent=1 // loop_header
      %s17 = sphi 0, %s21
      %p18 = scmp.ge.s32.totalorder %s17, 6
      %s24 = sphi 0, %s36
      %s25 = sphi 0, %s32
      %s26 = sphi 0, %s24
      %s27 = sphi 0, %s25
      %s28 = sphi 0, %s26
      %s29 = sphi 0, %s27
      %s39 = sphi 0, %s41
      %s42 = sphi 0, %s39
      %s43 = sphi 0, %s42
      %s59 = sphi 0, %s43
      %s65 = sphi 0, %s67
      %s68 = sphi 0, %s65
      %s69 = sphi 0, %s68
      %s85 = sphi 0, %s69
      %s91 = sphi 0, %s93
      %s94 = sphi 0, %s91
      %s95 = sphi 0, %s94
      %s111 = sphi 0, %s95
      %s117 = sphi 0, %s119
      %s120 = sphi 0, %s117
      %s121 = sphi 0, %s120
      %s137 = sphi 0, %s121
      %s141 = sphi 0, %s141
      %s143 = sphi 0, %s141
      %s144 = sphi 0, %s143
      %s158 = sphi 0, %s144
      %s164 = sphi 0, %s166
      %s167 = sphi 0, %s164
      %s168 = sphi 0, %s167
      %s184 = sphi 0, %s168
      %s188 = sphi 0, %s188
      %s190 = sphi 0, %s188
      %s191 = sphi 0, %s190
      %s205 = sphi 0, %s191
      %s211 = sphi 0, %s213
      %s214 = sphi 0, %s211
      %s215 = sphi 0, %s214
      %s231 = sphi 0, %s215
    $region4: #{tpu_custom_call.1} parent=1 // loop_header_branch
      %20 = sbr.rel (%p18) target = $region8
    $region5: #{tpu_custom_call.1} parent=1 // loop_body
      %s22 = ssub.s32 %s17, 1
      %s23 = ssub.s32 %s17, 2
      %s30 = sadd.s32 1, %s25
      %p31 = scmp.ge.s32.totalorder %s30, 4
      %s32 = scalar_select %p31, 0, %s30
      %s33 = sadd.s32 1, %s24
      %s34 = scalar_select %p31, %s33, %s24
      %p35 = scmp.ge.s32.totalorder %s34, 1
      %s36 = scalar_select %p35, 0, %s34
      %s37 = ssub.s32 %s24, %s36
      %p38 = scmp.eq.s32.totalorder %s37, 0
      %s40 = sadd.s32 %s39, 1
      %s41 = scalar_select %p38, %s39, %s40
      %p44 = pneg %p38
      %p45 = scmp.eq.s32.totalorder %s17, 3
      %p46 = por %p44, %p45
      %p47 = scmp.ne.s32.totalorder %s39, %s42
      %p48 = scmp.eq.s32.totalorder %s17, 0
      %p49 = por %p47, %p48
      %p50 = scmp.ne.s32.totalorder %s39, %s42
      %p51 = scmp.eq.s32.totalorder %s22, 3
      %p52 = por %p50, %p51
      %p53 = scmp.ne.s32.totalorder %s42, %s43
      %p54 = scmp.eq.s32.totalorder %s22, 0
      %p55 = por %p53, %p54
      %p56 = scmp.ne.s32.totalorder %s42, %s43
      %p57 = scmp.eq.s32.totalorder %s23, 3
      %p58 = por %p56, %p57
      %p60 = scmp.ne.s32.totalorder %s43, %s59
      %p61 = scmp.eq.s32.totalorder %s23, 0
      %p62 = por %p60, %p61
      %s63 = ssub.s32 %s25, %s32
      %p64 = scmp.eq.s32.totalorder %s63, 0
      %s66 = sadd.s32 %s65, 1
      %s67 = scalar_select %p64, %s65, %s66
      %p70 = pneg %p64
      %p71 = scmp.eq.s32.totalorder %s17, 3
      %p72 = por %p70, %p71
      %p73 = scmp.ne.s32.totalorder %s65, %s68
      %p74 = scmp.eq.s32.totalorder %s17, 0
      %p75 = por %p73, %p74
      %p76 = scmp.ne.s32.totalorder %s65, %s68
      %p77 = scmp.eq.s32.totalorder %s22, 3
      %p78 = por %p76, %p77
      %p79 = scmp.ne.s32.totalorder %s68, %s69
      %p80 = scmp.eq.s32.totalorder %s22, 0
      %p81 = por %p79, %p80
      %p82 = scmp.ne.s32.totalorder %s68, %s69
      %p83 = scmp.eq.s32.totalorder %s23, 3
      %p84 = por %p82, %p83
      %p86 = scmp.ne.s32.totalorder %s69, %s85
      %p87 = scmp.eq.s32.totalorder %s23, 0
      %p88 = por %p86, %p87
      %s89 = ssub.s32 %s25, %s32
      %p90 = scmp.eq.s32.totalorder %s89, 0
      %s92 = sadd.s32 %s91, 1
      %s93 = scalar_select %p90, %s91, %s92
      %p96 = pneg %p90
      %p97 = scmp.eq.s32.totalorder %s17, 3
      %p98 = por %p96, %p97
      %p99 = scmp.ne.s32.totalorder %s91, %s94
      %p100 = scmp.eq.s32.totalorder %s17, 0
      %p101 = por %p99, %p100
      %p102 = scmp.ne.s32.totalorder %s91, %s94
      %p103 = scmp.eq.s32.totalorder %s22, 3
      %p104 = por %p102, %p103
      %p105 = scmp.ne.s32.totalorder %s94, %s95
      %p106 = scmp.eq.s32.totalorder %s22, 0
      %p107 = por %p105, %p106
      %p108 = scmp.ne.s32.totalorder %s94, %s95
      %p109 = scmp.eq.s32.totalorder %s23, 3
      %p110 = por %p108, %p109
      %p112 = scmp.ne.s32.totalorder %s95, %s111
      %p113 = scmp.eq.s32.totalorder %s23, 0
      %p114 = por %p112, %p113
      %s115 = ssub.s32 %s25, %s32
      %p116 = scmp.eq.s32.totalorder %s115, 0
      %s118 = sadd.s32 %s117, 1
      %s119 = scalar_select %p116, %s117, %s118
      %p122 = pneg %p116
      %p123 = scmp.eq.s32.totalorder %s17, 3
      %p124 = por %p122, %p123
      %p125 = scmp.ne.s32.totalorder %s117, %s120
      %p126 = scmp.eq.s32.totalorder %s17, 0
      %p127 = por %p125, %p126
      %p128 = scmp.ne.s32.totalorder %s117, %s120
      %p129 = scmp.eq.s32.totalorder %s22, 3
      %p130 = por %p128, %p129
      %p131 = scmp.ne.s32.totalorder %s120, %s121
      %p132 = scmp.eq.s32.totalorder %s22, 0
      %p133 = por %p131, %p132
      %p134 = scmp.ne.s32.totalorder %s120, %s121
      %p135 = scmp.eq.s32.totalorder %s23, 3
      %p136 = por %p134, %p135
      %p138 = scmp.ne.s32.totalorder %s121, %s137
      %p139 = scmp.eq.s32.totalorder %s23, 0
      %p140 = por %p138, %p139
      %s142 = sadd.s32 %s141, 1
      %p145 = scmp.eq.s32.totalorder %s17, 3
      %p146 = scmp.ne.s32.totalorder %s141, %s143
      %p147 = scmp.eq.s32.totalorder %s17, 0
      %p148 = por %p146, %p147
      %p149 = scmp.ne.s32.totalorder %s141, %s143
      %p150 = scmp.eq.s32.totalorder %s22, 3
      %p151 = por %p149, %p150
      %p152 = scmp.ne.s32.totalorder %s143, %s144
      %p153 = scmp.eq.s32.totalorder %s22, 0
      %p154 = por %p152, %p153
      %p155 = scmp.ne.s32.totalorder %s143, %s144
      %p156 = scmp.eq.s32.totalorder %s23, 3
      %p157 = por %p155, %p156
      %p159 = scmp.ne.s32.totalorder %s144, %s158
      %p160 = scmp.eq.s32.totalorder %s23, 0
      %p161 = por %p159, %p160
      %s162 = ssub.s32 %s25, %s32
      %p163 = scmp.eq.s32.totalorder %s162, 0
      %s165 = sadd.s32 %s164, 1
      %s166 = scalar_select %p163, %s164, %s165
      %p169 = pneg %p163
      %p170 = scmp.eq.s32.totalorder %s17, 3
      %p171 = por %p169, %p170
      %p172 = scmp.ne.s32.totalorder %s164, %s167
      %p173 = scmp.eq.s32.totalorder %s17, 0
      %p174 = por %p172, %p173
      %p175 = scmp.ne.s32.totalorder %s164, %s167
      %p176 = scmp.eq.s32.totalorder %s22, 3
      %p177 = por %p175, %p176
      %p178 = scmp.ne.s32.totalorder %s167, %s168
      %p179 = scmp.eq.s32.totalorder %s22, 0
      %p180 = por %p178, %p179
      %p181 = scmp.ne.s32.totalorder %s167, %s168
      %p182 = scmp.eq.s32.totalorder %s23, 3
      %p183 = por %p181, %p182
      %p185 = scmp.ne.s32.totalorder %s168, %s184
      %p186 = scmp.eq.s32.totalorder %s23, 0
      %p187 = por %p185, %p186
      %s189 = sadd.s32 %s188, 1
      %p192 = scmp.eq.s32.totalorder %s17, 3
      %p193 = scmp.ne.s32.totalorder %s188, %s190
      %p194 = scmp.eq.s32.totalorder %s17, 0
      %p195 = por %p193, %p194
      %p196 = scmp.ne.s32.totalorder %s188, %s190
      %p197 = scmp.eq.s32.totalorder %s22, 3
      %p198 = por %p196, %p197
      %p199 = scmp.ne.s32.totalorder %s190, %s191
      %p200 = scmp.eq.s32.totalorder %s22, 0
      %p201 = por %p199, %p200
      %p202 = scmp.ne.s32.totalorder %s190, %s191
      %p203 = scmp.eq.s32.totalorder %s23, 3
      %p204 = por %p202, %p203
      %p206 = scmp.ne.s32.totalorder %s191, %s205
      %p207 = scmp.eq.s32.totalorder %s23, 0
      %p208 = por %p206, %p207
      %s209 = ssub.s32 %s24, %s36
      %p210 = scmp.eq.s32.totalorder %s209, 0
      %s212 = sadd.s32 %s211, 1
      %s213 = scalar_select %p210, %s211, %s212
      %p216 = pneg %p210
      %p217 = scmp.eq.s32.totalorder %s17, 3
      %p218 = por %p216, %p217
      %p219 = scmp.ne.s32.totalorder %s211, %s214
      %p220 = scmp.eq.s32.totalorder %s17, 0
      %p221 = por %p219, %p220
      %p222 = scmp.ne.s32.totalorder %s211, %s214
      %p223 = scmp.eq.s32.totalorder %s22, 3
      %p224 = por %p222, %p223
      %p225 = scmp.ne.s32.totalorder %s214, %s215
      %p226 = scmp.eq.s32.totalorder %s22, 0
      %p227 = por %p225, %p226
      %p228 = scmp.ne.s32.totalorder %s214, %s215
      %p229 = scmp.eq.s32.totalorder %s23, 3
      %p230 = por %p228, %p229
      %p232 = scmp.ne.s32.totalorder %s215, %s231
      %p233 = scmp.eq.s32.totalorder %s23, 0
      %p234 = por %p232, %p233
      %p235 = scmp.le.s32.totalorder 1, %s17
      %p236 = scmp.lt.s32.totalorder %s17, 5
      %p237 = pnand %p235, %p236
      %p238 = pneg %p237
      // Predicated region
      $region9: #{tpu_custom_call.1} parent=5 // pred_check
        _
      $region10: #{tpu_custom_call.1} parent=5 // pred_check_branch
        %240 = sbr.rel (%p237) target = $region12
      $region11: #{tpu_custom_call.1} parent=5 // pred_region
        %s241 = ssub.s32 %s17, 1
        // Predicated region
        $region13: #{tpu_custom_call.1} parent=11 // pred_check
          %p242 = pneg %p55
        $region14: #{tpu_custom_call.1} parent=11 // pred_check_branch
          %244 = sbr.rel (%p242) target = $region16
        $region15: #{tpu_custom_call.1} parent=11 // pred_region
          %s245 = smul.u32 16, %s26
          %p246 = scmp.lt.s32.totalorder %s245, 15
          %s247 = scalar_select %p246, %s245, 15
          %s248 = smul.addr %s247, 4
          %s249 = scalar_lea.vmem %s0, %s248
          %s250 = smul.u32 16, %s26
        $region16: #{tpu_custom_call.1} parent=11 // pred_fallthru
          _
        // Predicated region
        $region17: #{tpu_custom_call.1} parent=11 // pred_check
          %p251 = pneg %p154
        $region18: #{tpu_custom_call.1} parent=11 // pred_check_branch
          %253 = sbr.rel (%p251) target = $region20
        $region19: #{tpu_custom_call.1} parent=11 // pred_region
          _
        $region20: #{tpu_custom_call.1} parent=11 // pred_fallthru
          _
        // Predicated region
        $region21: #{tpu_custom_call.1} parent=11 // pred_check
          %p254 = pneg %p201
        $region22: #{tpu_custom_call.1} parent=11 // pred_check_branch
          %256 = sbr.rel (%p254) target = $region24
        $region23: #{tpu_custom_call.1} parent=11 // pred_region
          %s258 = ssub.s32 16, 16
          %259 = vsyncadd [#allocation5], %s258
          %s261 = sshll.u32 %s6, 4
          %s262 = int_to_ptr.vmem [resolvable:$true] %s261
          %264 = dma.vmem_to_smem %s262, 16, [#allocation6], [#allocation5]
        $region24: #{tpu_custom_call.1} parent=11 // pred_fallthru
          _
      $region12: #{tpu_custom_call.1} parent=5 // pred_fallthru
        _
      %p265 = scmp.lt.s32.totalorder %s17, 4
      // Predicated region
      $region25: #{tpu_custom_call.1} parent=5 // pred_check
        %p266 = pneg %p265
      $region26: #{tpu_custom_call.1} parent=5 // pred_check_branch
        %268 = sbr.rel (%p266) target = $region28
      $region27: #{tpu_custom_call.1} parent=5 // pred_region
        // Predicated region
        $region29: #{tpu_custom_call.1} parent=27 // pred_check
          %p269 = pneg %p75
        $region30: #{tpu_custom_call.1} parent=27 // pred_check_branch
          %271 = sbr.rel (%p269) target = $region32
        $region31: #{tpu_custom_call.1} parent=27 // pred_region
          %p272 = scmp.lt.s32.totalorder %s25, 3
          %s273 = scalar_select %p272, %s25, 3
          %s274 = smul.addr %s273, 4
          %s275 = smul.addr %s274, 4
          %s276 = scalar_lea.vmem %s1, %s275
        $region32: #{tpu_custom_call.1} parent=27 // pred_fallthru
          _
        // Predicated region
        $region33: #{tpu_custom_call.1} parent=27 // pred_check
          %p277 = pneg %p101
        $region34: #{tpu_custom_call.1} parent=27 // pred_check_branch
          %279 = sbr.rel (%p277) target = $region36
        $region35: #{tpu_custom_call.1} parent=27 // pred_region
          %p280 = scmp.lt.s32.totalorder %s25, 3
          %s281 = scalar_select %p280, %s25, 3
          %s282 = scalar_lea.vmem %s2, %s281
        $region36: #{tpu_custom_call.1} parent=27 // pred_fallthru
          _
        // Predicated region
        $region37: #{tpu_custom_call.1} parent=27 // pred_check
          %p283 = pneg %p127
        $region38: #{tpu_custom_call.1} parent=27 // pred_check_branch
          %285 = sbr.rel (%p283) target = $region40
        $region39: #{tpu_custom_call.1} parent=27 // pred_region
          %p286 = scmp.lt.s32.totalorder %s25, 3
          %s287 = scalar_select %p286, %s25, 3
          %s288 = smul.addr %s287, 4
          %s289 = scalar_lea.vmem %s3, %s288
        $region40: #{tpu_custom_call.1} parent=27 // pred_fallthru
          _
        // Predicated region
        $region41: #{tpu_custom_call.1} parent=27 // pred_check
          %p290 = pneg %p174
        $region42: #{tpu_custom_call.1} parent=27 // pred_check_branch
          %292 = sbr.rel (%p290) target = $region44
        $region43: #{tpu_custom_call.1} parent=27 // pred_region
          %s293 = sand.u32 %s164, 1
          %s294 = scalar_lea.sflag [#allocation4], %s293
          %s295 = sand.u32 %s164, 1
          %s296 = smul.addr %s295, 64
          %s297 = scalar_lea.vmem [#allocation3], %s296
          %s299 = ssub.s32 1024, 1024
          %300 = vsyncadd %s294, %s299
          %s301 = smul.addr %s25, 8
          %s302 = smul.addr %s301, 128
          %s303 = scalar_lea.hbm %s5, %s302
          %s304 = sshll.u32 %s297, 4
          %s305 = int_to_ptr.vmem [resolvable:$true] %s304
          %310 = dma.hbm_to_vmem [thread:$0]  %s303, 1024, %s305, %s294, 128, 128, 8
        $region44: #{tpu_custom_call.1} parent=27 // pred_fallthru
          _
      $region28: #{tpu_custom_call.1} parent=5 // pred_fallthru
        _
      %p311 = scmp.le.s32.totalorder 1, %s17
      %p312 = scmp.lt.s32.totalorder %s17, 5
      %p313 = pnand %p311, %p312
      %p314 = pneg %p313
      // Predicated region
      $region45: #{tpu_custom_call.1} parent=5 // pred_check
        _
      $region46: #{tpu_custom_call.1} parent=5 // pred_check_branch
        %316 = sbr.rel (%p313) target = $region48
      $region47: #{tpu_custom_call.1} parent=5 // pred_region
        %s317 = ssub.s32 %s17, 1
        %s318 = sand.u32 %s167, 1
        %s319 = scalar_lea.sflag [#allocation4], %s318
        %s320 = sand.u32 %s167, 1
        %s321 = smul.addr %s320, 64
        %s322 = scalar_lea.vmem [#allocation3], %s321
        // Predicated region
        $region49: #{tpu_custom_call.1} parent=47 // pred_check
          %p323 = pneg %p180
        $region50: #{tpu_custom_call.1} parent=47 // pred_check_branch
          %325 = sbr.rel (%p323) target = $region52
        $region51: #{tpu_custom_call.1} parent=47 // pred_region
          %326 = dma.done %s319, 1024
        $region52: #{tpu_custom_call.1} parent=47 // pred_fallthru
          _
        // Predicated region
        $region53: #{tpu_custom_call.1} parent=47 // pred_check
          %p327 = pneg %p201
        $region54: #{tpu_custom_call.1} parent=47 // pred_check_branch
          %329 = sbr.rel (%p327) target = $region56
        $region55: #{tpu_custom_call.1} parent=47 // pred_region
          %330 = dma.done [#allocation5], 16
        $region56: #{tpu_custom_call.1} parent=47 // pred_fallthru
          _
        %331 = sfence
        %s332 = smul.u32 16, %s26
        %p333 = scmp.lt.s32.totalorder %s332, 15
        %s334 = scalar_select %p333, %s332, 15
        %s335 = smul.addr %s334, 4
        %s336 = scalar_lea.vmem %s0, %s335
        %p337 = pneg %p55
        %p338 = pneg %p52
        %p339 = scmp.lt.s32.totalorder %s27, 3
        %s340 = scalar_select %p339, %s27, 3
        %s341 = smul.addr %s340, 4
        %s342 = smul.addr %s341, 4
        %s343 = scalar_lea.vmem %s1, %s342
        %p344 = pneg %p81
        %p345 = pneg %p78
        %p346 = scmp.lt.s32.totalorder %s27, 3
        %s347 = scalar_select %p346, %s27, 3
        %s348 = scalar_lea.vmem %s2, %s347
        %p349 = pneg %p107
        %p350 = pneg %p104
        %p351 = scmp.lt.s32.totalorder %s27, 3
        %s352 = scalar_select %p351, %s27, 3
        %s353 = smul.addr %s352, 4
        %s354 = scalar_lea.vmem %s3, %s353
        %p355 = pneg %p133
        %p356 = pneg %p130
        %p357 = pneg %p154
        %p358 = pneg %p151
        %s359 = sand.u32 %s167, 1
        %s360 = scalar_lea.sflag [#allocation4], %s359
        %s361 = sand.u32 %s167, 1
        %s362 = smul.addr %s361, 64
        %s363 = scalar_lea.vmem [#allocation3], %s362
        %p364 = pneg %p180
        %p365 = pneg %p177
        %p366 = pneg %p201
        %p367 = pneg %p198
        %p368 = pneg %p227
        %p369 = pneg %p224
        %s370 = smul.u32 16, %s26
        %p371 = scmp.lt.s32.totalorder %s370, 15
        %s372 = scalar_select %p371, %s370, 15
        %s373 = smul.addr %s372, 8
        %s374 = scalar_lea.vmem %s7, %s373
        %s375 = smul.u32 16, %s26
        %p376 = scmp.lt.s32.totalorder %s375, 15
        %s377 = scalar_select %p376, %s375, 15
        %s378 = smul.addr %s377, 4
        %s379 = scalar_lea.vmem %s0, %s378
        %s380 = smul.u32 16, %s26
        %p381 = scmp.lt.s32.totalorder %s27, 3
        %s382 = scalar_select %p381, %s27, 3
        %s383 = smul.addr %s382, 4
        %s384 = smul.addr %s383, 4
        %s385 = scalar_lea.vmem %s1, %s384
        %p386 = scmp.lt.s32.totalorder %s27, 3
        %s387 = scalar_select %p386, %s27, 3
        %s388 = scalar_lea.vmem %s2, %s387
        %p389 = scmp.lt.s32.totalorder %s27, 3
        %s390 = scalar_select %p389, %s27, 3
        %s391 = smul.addr %s390, 4
        %s392 = scalar_lea.vmem %s3, %s391
        %s393 = smul.u32 16, %s26
        %p394 = scmp.lt.s32.totalorder %s393, 15
        %s395 = scalar_select %p394, %s393, 15
        %s396 = smul.addr %s395, 8
        %s397 = scalar_lea.vmem %s7, %s396
        %s398 = smul.u32 16, %s26
        %p400 = scmp.eq.s32.totalorder %s27, 0
        // Predicated region
        $region57: #{tpu_custom_call.1} parent=47 // pred_check
          %p401 = pneg %p400
        $region58: #{tpu_custom_call.1} parent=47 // pred_check_branch
          %403 = sbr.rel (%p401) target = $region60
        $region59: #{tpu_custom_call.1} parent=47 // pred_region
          %vm404 = vcmask 261120
          %405 = vst.msk [vmem:[#allocation2] sm:$0xff] %vm404, 0.0
          %406 = vst.msk [vmem:[#allocation2 + $0x8] sm:$0xff] %vm404, 0.0
          %407 = vst.msk [vmem:[#allocation2 + $0x10] sm:$0xff] %vm404, 0.0
          %408 = vst.msk [vmem:[#allocation2 + $0x18] sm:$0xff] %vm404, 0.0
          %409 = vst.msk [vmem:[#allocation2 + $0x20] sm:$0xff] %vm404, 0.0
          %410 = vst.msk [vmem:[#allocation2 + $0x28] sm:$0xff] %vm404, 0.0
          %411 = vst.msk [vmem:[#allocation2 + $0x30] sm:$0xff] %vm404, 0.0
          %412 = vst.msk [vmem:[#allocation2 + $0x38] sm:$0xff] %vm404, 0.0
          %413 = vst.msk [vmem:[#allocation2 + $0x40] sm:$0xff] %vm404, 0.0
          %414 = vst.msk [vmem:[#allocation2 + $0x48] sm:$0xff] %vm404, 0.0
          %415 = vst.msk [vmem:[#allocation2 + $0x50] sm:$0xff] %vm404, 0.0
          %416 = vst.msk [vmem:[#allocation2 + $0x58] sm:$0xff] %vm404, 0.0
          %417 = vst.msk [vmem:[#allocation2 + $0x60] sm:$0xff] %vm404, 0.0
          %418 = vst.msk [vmem:[#allocation2 + $0x68] sm:$0xff] %vm404, 0.0
          %419 = vst.msk [vmem:[#allocation2 + $0x70] sm:$0xff] %vm404, 0.0
          %420 = vst.msk [vmem:[#allocation2 + $0x78] sm:$0xff] %vm404, 0.0
        $region60: #{tpu_custom_call.1} parent=47 // pred_fallthru
          _
        %v421 = vld [vmem:[%s379] sm:$0xf]
        %v422 = vld [vmem:[%s379 + $0x4] sm:$0xf]
        %v423 = vld [vmem:[%s379 + $0x8] sm:$0xf]
        %v424 = vld [vmem:[%s379 + $0xc] sm:$0xf]
        %v425 = vld [vmem:[%s379 + $0x10] sm:$0xf]
        %v426 = vld [vmem:[%s379 + $0x14] sm:$0xf]
        %v427 = vld [vmem:[%s379 + $0x18] sm:$0xf]
        %v428 = vld [vmem:[%s379 + $0x1c] sm:$0xf]
        %v429 = vld [vmem:[%s379 + $0x20] sm:$0xf]
        %v430 = vld [vmem:[%s379 + $0x24] sm:$0xf]
        %v431 = vld [vmem:[%s379 + $0x28] sm:$0xf]
        %v432 = vld [vmem:[%s379 + $0x2c] sm:$0xf]
        %v433 = vld [vmem:[%s379 + $0x30] sm:$0xf]
        %v434 = vld [vmem:[%s379 + $0x34] sm:$0xf]
        %v435 = vld [vmem:[%s379 + $0x38] sm:$0xf]
        %v436 = vld [vmem:[%s379 + $0x3c] sm:$0xf]
        %v437 = vld [vmem:[%s385] sm:$0xf]
        %v438 = vld [vmem:[%s385 + $0x4] sm:$0xf]
        %v439 = vld [vmem:[%s385 + $0x8] sm:$0xf]
        %v440 = vld [vmem:[%s385 + $0xc] sm:$0xf]
        %v441 = vld [vmem:[%s388] sm:$0x1]
        %v443 = vlaneseq
        %v444 = vshrl.u32 %v443, 7
        %v445 = vsub.s32 0, %v444
        %v446 = vrot.slane %v441, %v445
        %v464 = vunpack.c.l.b16 %v421
        %v465 = vunpack.c.l.b16 %v422
        %v466 = vunpack.c.l.b16 %v423
        %v467 = vunpack.c.l.b16 %v424
        %v468 = vunpack.c.l.b16 %v425
        %v469 = vunpack.c.l.b16 %v426
        %v470 = vunpack.c.l.b16 %v427
        %v471 = vunpack.c.l.b16 %v428
        %v472 = vunpack.c.l.b16 %v429
        %v473 = vunpack.c.l.b16 %v430
        %v474 = vunpack.c.l.b16 %v431
        %v475 = vunpack.c.l.b16 %v432
        %v476 = vunpack.c.l.b16 %v433
        %v477 = vunpack.c.l.b16 %v434
        %v478 = vunpack.c.l.b16 %v435
        %v479 = vunpack.c.l.b16 %v436
        %v480 = vpack.c.b16 %v465, %v464
        %v481 = vpack.c.b16 %v467, %v466
        %v482 = vpack.c.b16 %v469, %v468
        %v483 = vpack.c.b16 %v471, %v470
        %v484 = vpack.c.b16 %v473, %v472
        %v485 = vpack.c.b16 %v475, %v474
        %v486 = vpack.c.b16 %v477, %v476
        %v487 = vpack.c.b16 %v479, %v478
        %v492 = vunpack.c.l.b16 %v437
        %v493 = vunpack.c.l.b16 %v438
        %v494 = vunpack.c.l.b16 %v439
        %v495 = vunpack.c.l.b16 %v440
        %v496 = vpack.c.b16 %v493, %v492
        %v497 = vpack.c.b16 %v495, %v494
        %vm500 = vcmask 261120
        %v502 = vsel %vm500, %v480, 0
        %v505 = vsel %vm500, %v481, 0
        %v508 = vsel %vm500, %v482, 0
        %v511 = vsel %vm500, %v483, 0
        %v514 = vsel %vm500, %v484, 0
        %v517 = vsel %vm500, %v485, 0
        %v520 = vsel %vm500, %v486, 0
        %v523 = vsel %vm500, %v487, 0
        %525 = vmatprep.subr.bf16.mxu0 0
        %526 = vmatpush1.bf16.msra.mxu0 %v496
        %527 = vmatprep.subr.bf16.mxu0 0
        %528 = vmatpush1.bf16.msra.mxu0 %v497
        %529 = vmatprep.subr.bf16.mxu0 0
        %530 = vmatpush1.bf16.msra.mxu0 0
        %531 = vmatprep.subr.bf16.mxu0 0
        %532 = vmatpush1.bf16.msra.mxu0 0
        %533 = vmatprep.subr.bf16.mxu0 0
        %534 = vmatpush1.bf16.msra.mxu0 0
        %535 = vmatprep.subr.bf16.mxu0 0
        %536 = vmatpush1.bf16.msra.mxu0 0
        %537 = vmatprep.subr.bf16.mxu0 0
        %538 = vmatpush1.bf16.msra.mxu0 0
        %539 = vmatprep.subr.bf16.mxu0 0
        %540 = vmatpush1.bf16.msra.mxu0 0
        %541 = vmatprep.subr.bf16.mxu0 0
        %542 = vmatpush1.bf16.msra.mxu0 0
        %543 = vmatprep.subr.bf16.mxu0 0
        %544 = vmatpush1.bf16.msra.mxu0 0
        %545 = vmatprep.subr.bf16.mxu0 0
        %546 = vmatpush1.bf16.msra.mxu0 0
        %547 = vmatprep.subr.bf16.mxu0 0
        %548 = vmatpush1.bf16.msra.mxu0 0
        %549 = vmatprep.subr.bf16.mxu0 0
        %550 = vmatpush1.bf16.msra.mxu0 0
        %551 = vmatprep.subr.bf16.mxu0 0
        %552 = vmatpush1.bf16.msra.mxu0 0
        %553 = vmatprep.subr.bf16.mxu0 0
        %554 = vmatpush1.bf16.msra.mxu0 0
        %555 = vmatprep.subr.bf16.mxu0 0
        %556 = vmatpush1.bf16.msra.mxu0 0
        %557 = vmatprep.mubr.bf16.mxu0 0
        %558 = vmatmul.mubr.bf16.gmra.mrb[0].mxu0 %v502
        %v559 = vpop.f32.mrb[0].mxu0
        %v560 = vadd.f32 %v446, %v559
        %v561 = vpop.f32.mrb[0].mxu0
        %v562 = vpop.f32.mrb[0].mxu0
        %v563 = vadd.f32 %v446, %v562
        %v564 = vpop.f32.mrb[0].mxu0
        %565 = vmatprep.mubr.bf16.mxu0 0
        %566 = vmatmul.mubr.bf16.gmra.mrb[0].mxu0 %v505
        %v567 = vpop.f32.mrb[0].mxu0
        %v568 = vadd.f32 %v446, %v567
        %v569 = vpop.f32.mrb[0].mxu0
        %v570 = vpop.f32.mrb[0].mxu0
        %v571 = vadd.f32 %v446, %v570
        %v572 = vpop.f32.mrb[0].mxu0
        %573 = vmatprep.mubr.bf16.mxu0 0
        %574 = vmatmul.mubr.bf16.gmra.mrb[0].mxu0 %v508
        %v575 = vpop.f32.mrb[0].mxu0
        %v576 = vadd.f32 %v446, %v575
        %v577 = vpop.f32.mrb[0].mxu0
        %v578 = vpop.f32.mrb[0].mxu0
        %v579 = vadd.f32 %v446, %v578
        %v580 = vpop.f32.mrb[0].mxu0
        %581 = vmatprep.mubr.bf16.mxu0 0
        %582 = vmatmul.mubr.bf16.gmra.mrb[0].mxu0 %v511
        %v583 = vpop.f32.mrb[0].mxu0
        %v584 = vadd.f32 %v446, %v583
        %v585 = vpop.f32.mrb[0].mxu0
        %v586 = vpop.f32.mrb[0].mxu0
        %v587 = vadd.f32 %v446, %v586
        %v588 = vpop.f32.mrb[0].mxu0
        %589 = vmatprep.mubr.bf16.mxu0 0
        %590 = vmatmul.mubr.bf16.gmra.mrb[0].mxu0 %v514
        %v591 = vpop.f32.mrb[0].mxu0
        %v592 = vadd.f32 %v446, %v591
        %v593 = vpop.f32.mrb[0].mxu0
        %v594 = vpop.f32.mrb[0].mxu0
        %v595 = vadd.f32 %v446, %v594
        %v596 = vpop.f32.mrb[0].mxu0
        %597 = vmatprep.mubr.bf16.mxu0 0
        %598 = vmatmul.mubr.bf16.gmra.mrb[0].mxu0 %v517
        %v599 = vpop.f32.mrb[0].mxu0
        %v600 = vadd.f32 %v446, %v599
        %v601 = vpop.f32.mrb[0].mxu0
        %v602 = vpop.f32.mrb[0].mxu0
        %v603 = vadd.f32 %v446, %v602
        %v604 = vpop.f32.mrb[0].mxu0
        %605 = vmatprep.mubr.bf16.mxu0 0
        %606 = vmatmul.mubr.bf16.gmra.mrb[0].mxu0 %v520
        %v607 = vpop.f32.mrb[0].mxu0
        %v608 = vadd.f32 %v446, %v607
        %v609 = vpop.f32.mrb[0].mxu0
        %v610 = vpop.f32.mrb[0].mxu0
        %v611 = vadd.f32 %v446, %v610
        %v612 = vpop.f32.mrb[0].mxu0
        %613 = vmatprep.mubr.bf16.mxu0 0
        %614 = vmatmul.mubr.bf16.gmra.mrb[0].mxu0 %v523
        %v615 = vpop.f32.mrb[0].mxu0
        %v616 = vadd.f32 %v446, %v615
        %v617 = vpop.f32.mrb[0].mxu0
        %v618 = vpop.f32.mrb[0].mxu0
        %v619 = vadd.f32 %v446, %v618
        %v620 = vpop.f32.mrb[0].mxu0
        %621 = vdwg.mxu0
        %v622 = vmul.f32 %v560, %v560
        %v623 = vmul.f32 %v563, %v563
        %v624 = vmul.f32 %v568, %v568
        %v625 = vmul.f32 %v571, %v571
        %v626 = vmul.f32 %v576, %v576
        %v627 = vmul.f32 %v579, %v579
        %v628 = vmul.f32 %v584, %v584
        %v629 = vmul.f32 %v587, %v587
        %v630 = vmul.f32 %v592, %v592
        %v631 = vmul.f32 %v595, %v595
        %v632 = vmul.f32 %v600, %v600
        %v633 = vmul.f32 %v603, %v603
        %v634 = vmul.f32 %v608, %v608
        %v635 = vmul.f32 %v611, %v611
        %v636 = vmul.f32 %v616, %v616
        %v637 = vmul.f32 %v619, %v619
        %vm638 = vcmask 64512
        %v639 = vsel %vm638, %v622, 0.0
        %640 = vadd.xlane.f32.xlu0 %v639
        %v641 = vpop.xlane.xlu0 %640
        %v642 = vsel %vm638, %v623, 0.0
        %643 = vadd.xlane.f32.xlu0 %v642
        %v644 = vpop.xlane.xlu0 %643
        %v645 = vsel %vm638, %v624, 0.0
        %646 = vadd.xlane.f32.xlu0 %v645
        %v647 = vpop.xlane.xlu0 %646
        %v648 = vsel %vm638, %v625, 0.0
        %649 = vadd.xlane.f32.xlu0 %v648
        %v650 = vpop.xlane.xlu0 %649
        %v651 = vsel %vm638, %v626, 0.0
        %652 = vadd.xlane.f32.xlu0 %v651
        %v653 = vpop.xlane.xlu0 %652
        %v654 = vsel %vm638, %v627, 0.0
        %655 = vadd.xlane.f32.xlu0 %v654
        %v656 = vpop.xlane.xlu0 %655
        %v657 = vsel %vm638, %v628, 0.0
        %658 = vadd.xlane.f32.xlu0 %v657
        %v659 = vpop.xlane.xlu0 %658
        %v660 = vsel %vm638, %v629, 0.0
        %661 = vadd.xlane.f32.xlu0 %v660
        %v662 = vpop.xlane.xlu0 %661
        %v663 = vsel %vm638, %v630, 0.0
        %664 = vadd.xlane.f32.xlu0 %v663
        %v665 = vpop.xlane.xlu0 %664
        %v666 = vsel %vm638, %v631, 0.0
        %667 = vadd.xlane.f32.xlu0 %v666
        %v668 = vpop.xlane.xlu0 %667
        %v669 = vsel %vm638, %v632, 0.0
        %670 = vadd.xlane.f32.xlu0 %v669
        %v671 = vpop.xlane.xlu0 %670
        %v672 = vsel %vm638, %v633, 0.0
        %673 = vadd.xlane.f32.xlu0 %v672
        %v674 = vpop.xlane.xlu0 %673
        %v675 = vsel %vm638, %v634, 0.0
        %676 = vadd.xlane.f32.xlu0 %v675
        %v677 = vpop.xlane.xlu0 %676
        %v678 = vsel %vm638, %v635, 0.0
        %679 = vadd.xlane.f32.xlu0 %v678
        %v680 = vpop.xlane.xlu0 %679
        %v681 = vsel %vm638, %v636, 0.0
        %682 = vadd.xlane.f32.xlu0 %v681
        %v683 = vpop.xlane.xlu0 %682
        %v684 = vsel %vm638, %v637, 0.0
        %685 = vadd.xlane.f32.xlu0 %v684
        %v686 = vpop.xlane.xlu0 %685
        %v687 = vmax.f32 %v641, 1e-24
        %v688 = vmax.f32 %v644, 1e-24
        %v689 = vmax.f32 %v647, 1e-24
        %v690 = vmax.f32 %v650, 1e-24
        %v691 = vmax.f32 %v653, 1e-24
        %v692 = vmax.f32 %v656, 1e-24
        %v693 = vmax.f32 %v659, 1e-24
        %v694 = vmax.f32 %v662, 1e-24
        %v695 = vmax.f32 %v665, 1e-24
        %v696 = vmax.f32 %v668, 1e-24
        %v697 = vmax.f32 %v671, 1e-24
        %v698 = vmax.f32 %v674, 1e-24
        %v699 = vmax.f32 %v677, 1e-24
        %v700 = vmax.f32 %v680, 1e-24
        %v701 = vmax.f32 %v683, 1e-24
        %v702 = vmax.f32 %v686, 1e-24
        %v703 = vrsqrt.pop %v687
        %v704 = vrsqrt.pop %v688
        %v705 = vrsqrt.pop %v689
        %v706 = vrsqrt.pop %v690
        %v707 = vrsqrt.pop %v691
        %v708 = vrsqrt.pop %v692
        %v709 = vrsqrt.pop %v693
        %v710 = vrsqrt.pop %v694
        %v711 = vrsqrt.pop %v695
        %v712 = vrsqrt.pop %v696
        %v713 = vrsqrt.pop %v697
        %v714 = vrsqrt.pop %v698
        %v715 = vrsqrt.pop %v699
        %v716 = vrsqrt.pop %v700
        %v717 = vrsqrt.pop %v701
        %v718 = vrsqrt.pop %v702
        %s719 = sld [smem:[#allocation6 + %s27]]
        %v720 = vstv %s719
        %v721 = vmul.f32 %v703, %v720
        %v722 = vmul.f32 %v704, %v720
        %v723 = vmul.f32 %v705, %v720
        %v724 = vmul.f32 %v706, %v720
        %v725 = vmul.f32 %v707, %v720
        %v726 = vmul.f32 %v708, %v720
        %v727 = vmul.f32 %v709, %v720
        %v728 = vmul.f32 %v710, %v720
        %v729 = vmul.f32 %v711, %v720
        %v730 = vmul.f32 %v712, %v720
        %v731 = vmul.f32 %v713, %v720
        %v732 = vmul.f32 %v714, %v720
        %v733 = vmul.f32 %v715, %v720
        %v734 = vmul.f32 %v716, %v720
        %v735 = vmul.f32 %v717, %v720
        %v736 = vmul.f32 %v718, %v720
        %v737 = vmul.f32 %v560, %v721
        %v738 = vmul.f32 %v563, %v722
        %v739 = vmul.f32 %v568, %v723
        %v740 = vmul.f32 %v571, %v724
        %v741 = vmul.f32 %v576, %v725
        %v742 = vmul.f32 %v579, %v726
        %v743 = vmul.f32 %v584, %v727
        %v744 = vmul.f32 %v587, %v728
        %v745 = vmul.f32 %v592, %v729
        %v746 = vmul.f32 %v595, %v730
        %v747 = vmul.f32 %v600, %v731
        %v748 = vmul.f32 %v603, %v732
        %v749 = vmul.f32 %v608, %v733
        %v750 = vmul.f32 %v611, %v734
        %v751 = vmul.f32 %v616, %v735
        %v752 = vmul.f32 %v619, %v736
        %769 = vrot.lane.b32.xlu0 %v622, 120
        %v770 = vpop.permute.xlu0 %769
        %771 = vrot.lane.b32.xlu0 %v623, 120
        %v772 = vpop.permute.xlu0 %771
        %773 = vrot.lane.b32.xlu0 %v624, 120
        %v774 = vpop.permute.xlu0 %773
        %775 = vrot.lane.b32.xlu0 %v625, 120
        %v776 = vpop.permute.xlu0 %775
        %777 = vrot.lane.b32.xlu0 %v626, 120
        %v778 = vpop.permute.xlu0 %777
        %779 = vrot.lane.b32.xlu0 %v627, 120
        %v780 = vpop.permute.xlu0 %779
        %781 = vrot.lane.b32.xlu0 %v628, 120
        %v782 = vpop.permute.xlu0 %781
        %783 = vrot.lane.b32.xlu0 %v629, 120
        %v784 = vpop.permute.xlu0 %783
        %785 = vrot.lane.b32.xlu0 %v630, 120
        %v786 = vpop.permute.xlu0 %785
        %787 = vrot.lane.b32.xlu0 %v631, 120
        %v788 = vpop.permute.xlu0 %787
        %789 = vrot.lane.b32.xlu0 %v632, 120
        %v790 = vpop.permute.xlu0 %789
        %791 = vrot.lane.b32.xlu0 %v633, 120
        %v792 = vpop.permute.xlu0 %791
        %793 = vrot.lane.b32.xlu0 %v634, 120
        %v794 = vpop.permute.xlu0 %793
        %795 = vrot.lane.b32.xlu0 %v635, 120
        %v796 = vpop.permute.xlu0 %795
        %797 = vrot.lane.b32.xlu0 %v636, 120
        %v798 = vpop.permute.xlu0 %797
        %799 = vrot.lane.b32.xlu0 %v637, 120
        %v800 = vpop.permute.xlu0 %799
        %v817 = vsel %vm638, %v770, 0.0
        %818 = vadd.xlane.f32.xlu0 %v817
        %v819 = vpop.xlane.xlu0 %818
        %v820 = vsel %vm638, %v772, 0.0
        %821 = vadd.xlane.f32.xlu0 %v820
        %v822 = vpop.xlane.xlu0 %821
        %v823 = vsel %vm638, %v774, 0.0
        %824 = vadd.xlane.f32.xlu0 %v823
        %v825 = vpop.xlane.xlu0 %824
        %v826 = vsel %vm638, %v776, 0.0
        %827 = vadd.xlane.f32.xlu0 %v826
        %v828 = vpop.xlane.xlu0 %827
        %v829 = vsel %vm638, %v778, 0.0
        %830 = vadd.xlane.f32.xlu0 %v829
        %v831 = vpop.xlane.xlu0 %830
        %v832 = vsel %vm638, %v780, 0.0
        %833 = vadd.xlane.f32.xlu0 %v832
        %v834 = vpop.xlane.xlu0 %833
        %v835 = vsel %vm638, %v782, 0.0
        %836 = vadd.xlane.f32.xlu0 %v835
        %v837 = vpop.xlane.xlu0 %836
        %v838 = vsel %vm638, %v784, 0.0
        %839 = vadd.xlane.f32.xlu0 %v838
        %v840 = vpop.xlane.xlu0 %839
        %v841 = vsel %vm638, %v786, 0.0
        %842 = vadd.xlane.f32.xlu0 %v841
        %v843 = vpop.xlane.xlu0 %842
        %v844 = vsel %vm638, %v788, 0.0
        %845 = vadd.xlane.f32.xlu0 %v844
        %v846 = vpop.xlane.xlu0 %845
        %v847 = vsel %vm638, %v790, 0.0
        %848 = vadd.xlane.f32.xlu0 %v847
        %v849 = vpop.xlane.xlu0 %848
        %v850 = vsel %vm638, %v792, 0.0
        %851 = vadd.xlane.f32.xlu0 %v850
        %v852 = vpop.xlane.xlu0 %851
        %v853 = vsel %vm638, %v794, 0.0
        %854 = vadd.xlane.f32.xlu0 %v853
        %v855 = vpop.xlane.xlu0 %854
        %v856 = vsel %vm638, %v796, 0.0
        %857 = vadd.xlane.f32.xlu0 %v856
        %v858 = vpop.xlane.xlu0 %857
        %v859 = vsel %vm638, %v798, 0.0
        %860 = vadd.xlane.f32.xlu0 %v859
        %v861 = vpop.xlane.xlu0 %860
        %v862 = vsel %vm638, %v800, 0.0
        %863 = vadd.xlane.f32.xlu0 %v862
        %v864 = vpop.xlane.xlu0 %863
        %v865 = vmax.f32 %v819, 1e-24
        %v866 = vmax.f32 %v822, 1e-24
        %v867 = vmax.f32 %v825, 1e-24
        %v868 = vmax.f32 %v828, 1e-24
        %v869 = vmax.f32 %v831, 1e-24
        %v870 = vmax.f32 %v834, 1e-24
        %v871 = vmax.f32 %v837, 1e-24
        %v872 = vmax.f32 %v840, 1e-24
        %v873 = vmax.f32 %v843, 1e-24
        %v874 = vmax.f32 %v846, 1e-24
        %v875 = vmax.f32 %v849, 1e-24
        %v876 = vmax.f32 %v852, 1e-24
        %v877 = vmax.f32 %v855, 1e-24
        %v878 = vmax.f32 %v858, 1e-24
        %v879 = vmax.f32 %v861, 1e-24
        %v880 = vmax.f32 %v864, 1e-24
        %v881 = vrsqrt.pop %v865
        %v882 = vrsqrt.pop %v866
        %v883 = vrsqrt.pop %v867
        %v884 = vrsqrt.pop %v868
        %v885 = vrsqrt.pop %v869
        %v886 = vrsqrt.pop %v870
        %v887 = vrsqrt.pop %v871
        %v888 = vrsqrt.pop %v872
        %v889 = vrsqrt.pop %v873
        %v890 = vrsqrt.pop %v874
        %v891 = vrsqrt.pop %v875
        %v892 = vrsqrt.pop %v876
        %v893 = vrsqrt.pop %v877
        %v894 = vrsqrt.pop %v878
        %v895 = vrsqrt.pop %v879
        %v896 = vrsqrt.pop %v880
        %v897 = vmul.f32 %v560, %v881
        %v898 = vmul.f32 %v563, %v882
        %v899 = vmul.f32 %v568, %v883
        %v900 = vmul.f32 %v571, %v884
        %v901 = vmul.f32 %v576, %v885
        %v902 = vmul.f32 %v579, %v886
        %v903 = vmul.f32 %v584, %v887
        %v904 = vmul.f32 %v587, %v888
        %v905 = vmul.f32 %v592, %v889
        %v906 = vmul.f32 %v595, %v890
        %v907 = vmul.f32 %v600, %v891
        %v908 = vmul.f32 %v603, %v892
        %v909 = vmul.f32 %v608, %v893
        %v910 = vmul.f32 %v611, %v894
        %v911 = vmul.f32 %v616, %v895
        %v912 = vmul.f32 %v619, %v896
        %v913 = vpack.c.bf16 %v738, %v737
        %v914 = vpack.c.bf16 %v740, %v739
        %v915 = vpack.c.bf16 %v742, %v741
        %v916 = vpack.c.bf16 %v744, %v743
        %v917 = vpack.c.bf16 %v746, %v745
        %v918 = vpack.c.bf16 %v748, %v747
        %v919 = vpack.c.bf16 %v750, %v749
        %v920 = vpack.c.bf16 %v752, %v751
        %v921 = vpack.c.bf16 %v898, %v897
        %v922 = vpack.c.bf16 %v900, %v899
        %v923 = vpack.c.bf16 %v902, %v901
        %v924 = vpack.c.bf16 %v904, %v903
        %v925 = vpack.c.bf16 %v906, %v905
        %v926 = vpack.c.bf16 %v908, %v907
        %v927 = vpack.c.bf16 %v910, %v909
        %v928 = vpack.c.bf16 %v912, %v911
        %v929 = vpack.c.bf16 %v563, %v560
        %v930 = vpack.c.bf16 %v571, %v568
        %v931 = vpack.c.bf16 %v579, %v576
        %v932 = vpack.c.bf16 %v587, %v584
        %v933 = vpack.c.bf16 %v595, %v592
        %v934 = vpack.c.bf16 %v603, %v600
        %v935 = vpack.c.bf16 %v611, %v608
        %v936 = vpack.c.bf16 %v619, %v616
        %938 = vrot.lane.b32.xlu0 %v921, 120
        %v939 = vpop.permute.xlu0 %938
        %v941 = vsel %vm638, %v913, 0
        %v944 = vsel %vm638, %v939, 0
        %946 = vmatprep.subr.bf16.mxu0 0
        %947 = vmatpush1.bf16.xpose.msra.mxu0 %v944
        %948 = vmatprep.subr.bf16.mxu0 0
        %949 = vmatpush1.bf16.xpose.msra.mxu0 0
        %950 = vmatprep.subr.bf16.mxu0 0
        %951 = vmatpush1.bf16.xpose.msra.mxu0 0
        %952 = vmatprep.subr.bf16.mxu0 0
        %953 = vmatpush1.bf16.xpose.msra.mxu0 0
        %954 = vmatprep.subr.bf16.mxu0 0
        %955 = vmatpush1.bf16.xpose.msra.mxu0 0
        %956 = vmatprep.subr.bf16.mxu0 0
        %957 = vmatpush1.bf16.xpose.msra.mxu0 0
        %958 = vmatprep.subr.bf16.mxu0 0
        %959 = vmatpush1.bf16.xpose.msra.mxu0 0
        %960 = vmatprep.subr.bf16.mxu0 0
        %961 = vmatpush1.bf16.xpose.msra.mxu0 0
        %962 = vmatprep.subr.bf16.mxu0 0
        %963 = vmatpush1.bf16.xpose.msra.mxu0 0
        %964 = vmatprep.subr.bf16.mxu0 0
        %965 = vmatpush1.bf16.xpose.msra.mxu0 0
        %966 = vmatprep.subr.bf16.mxu0 0
        %967 = vmatpush1.bf16.xpose.msra.mxu0 0
        %968 = vmatprep.subr.bf16.mxu0 0
        %969 = vmatpush1.bf16.xpose.msra.mxu0 0
        %970 = vmatprep.subr.bf16.mxu0 0
        %971 = vmatpush1.bf16.xpose.msra.mxu0 0
        %972 = vmatprep.subr.bf16.mxu0 0
        %973 = vmatpush1.bf16.xpose.msra.mxu0 0
        %974 = vmatprep.subr.bf16.mxu0 0
        %975 = vmatpush1.bf16.xpose.msra.mxu0 0
        %976 = vmatprep.subr.bf16.mxu0 0
        %977 = vmatpush1.bf16.xpose.msra.mxu0 0
        %978 = vmatprep.mubr.bf16.mxu0 0
        %979 = vmatmul.mubr.bf16.gmra.mrb[0].mxu0 %v941
        %v980 = vpop.f32.mrb[0].mxu0
        %v981 = vadd.f32 0.0, %v980
        %v982 = vpop.f32.mrb[0].mxu0
        %v983 = vpop.f32.mrb[0].mxu0
        %v984 = vadd.f32 0.0, %v983
        %v985 = vpop.f32.mrb[0].mxu0
        %986 = vdwg.mxu0
        %988 = vrot.lane.b32.xlu0 %v922, 120
        %v989 = vpop.permute.xlu0 %988
        %v991 = vsel %vm638, %v914, 0
        %v994 = vsel %vm638, %v989, 0
        %996 = vmatprep.subr.bf16.mxu0 0
        %997 = vmatpush1.bf16.xpose.msra.mxu0 %v994
        %998 = vmatprep.subr.bf16.mxu0 0
        %999 = vmatpush1.bf16.xpose.msra.mxu0 0
        %1000 = vmatprep.subr.bf16.mxu0 0
        %1001 = vmatpush1.bf16.xpose.msra.mxu0 0
        %1002 = vmatprep.subr.bf16.mxu0 0
        %1003 = vmatpush1.bf16.xpose.msra.mxu0 0
        %1004 = vmatprep.subr.bf16.mxu0 0
        %1005 = vmatpush1.bf16.xpose.msra.mxu0 0
        %1006 = vmatprep.subr.bf16.mxu0 0
        %1007 = vmatpush1.bf16.xpose.msra.mxu0 0
        %1008 = vmatprep.subr.bf16.mxu0 0
        %1009 = vmatpush1.bf16.xpose.msra.mxu0 0
        %1010 = vmatprep.subr.bf16.mxu0 0
        %1011 = vmatpush1.bf16.xpose.msra.mxu0 0
        %1012 = vmatprep.subr.bf16.mxu0 0
        %1013 = vmatpush1.bf16.xpose.msra.mxu0 0
        %1014 = vmatprep.subr.bf16.mxu0 0
        %1015 = vmatpush1.bf16.xpose.msra.mxu0 0
        %1016 = vmatprep.subr.bf16.mxu0 0
        %1017 = vmatpush1.bf16.xpose.msra.mxu0 0
        %1018 = vmatprep.subr.bf16.mxu0 0
        %1019 = vmatpush1.bf16.xpose.msra.mxu0 0
        %1020 = vmatprep.subr.bf16.mxu0 0
        %1021 = vmatpush1.bf16.xpose.msra.mxu0 0
        %1022 = vmatprep.subr.bf16.mxu0 0
        %1023 = vmatpush1.bf16.xpose.msra.mxu0 0
        %1024 = vmatprep.subr.bf16.mxu0 0
        %1025 = vmatpush1.bf16.xpose.msra.mxu0 0
        %1026 = vmatprep.subr.bf16.mxu0 0
        %1027 = vmatpush1.bf16.xpose.msra.mxu0 0
        %1028 = vmatprep.mubr.bf16.mxu0 0
        %1029 = vmatmul.mubr.bf16.gmra.mrb[0].mxu0 %v991
        %v1030 = vpop.f32.mrb[0].mxu0
        %v1031 = vadd.f32 0.0, %v1030
        %v1032 = vpop.f32.mrb[0].mxu0
        %v1033 = vpop.f32.mrb[0].mxu0
        %v1034 = vadd.f32 0.0, %v1033
        %v1035 = vpop.f32.mrb[0].mxu0
        %1036 = vdwg.mxu0
        %1038 = vrot.lane.b32.xlu0 %v923, 120
        %v1039 = vpop.permute.xlu0 %1038
        %v1041 = vsel %vm638, %v915, 0
        %v1044 = vsel %vm638, %v1039, 0
        %1046 = vmatprep.subr.bf16.mxu0 0
        %1047 = vmatpush1.bf16.xpose.msra.mxu0 %v1044
        %1048 = vmatprep.subr.bf16.mxu0 0
        %1049 = vmatpush1.bf16.xpose.msra.mxu0 0
        %1050 = vmatprep.subr.bf16.mxu0 0
        %1051 = vmatpush1.bf16.xpose.msra.mxu0 0
        %1052 = vmatprep.subr.bf16.mxu0 0
        %1053 = vmatpush1.bf16.xpose.msra.mxu0 0
        %1054 = vmatprep.subr.bf16.mxu0 0
        %1055 = vmatpush1.bf16.xpose.msra.mxu0 0
        %1056 = vmatprep.subr.bf16.mxu0 0
        %1057 = vmatpush1.bf16.xpose.msra.mxu0 0
        %1058 = vmatprep.subr.bf16.mxu0 0
        %1059 = vmatpush1.bf16.xpose.msra.mxu0 0
        %1060 = vmatprep.subr.bf16.mxu0 0
        %1061 = vmatpush1.bf16.xpose.msra.mxu0 0
        %1062 = vmatprep.subr.bf16.mxu0 0
        %1063 = vmatpush1.bf16.xpose.msra.mxu0 0
        %1064 = vmatprep.subr.bf16.mxu0 0
        %1065 = vmatpush1.bf16.xpose.msra.mxu0 0
        %1066 = vmatprep.subr.bf16.mxu0 0
        %1067 = vmatpush1.bf16.xpose.msra.mxu0 0
        %1068 = vmatprep.subr.bf16.mxu0 0
        %1069 = vmatpush1.bf16.xpose.msra.mxu0 0
        %1070 = vmatprep.subr.bf16.mxu0 0
        %1071 = vmatpush1.bf16.xpose.msra.mxu0 0
        %1072 = vmatprep.subr.bf16.mxu0 0
        %1073 = vmatpush1.bf16.xpose.msra.mxu0 0
        %1074 = vmatprep.subr.bf16.mxu0 0
        %1075 = vmatpush1.bf16.xpose.msra.mxu0 0
        %1076 = vmatprep.subr.bf16.mxu0 0
        %1077 = vmatpush1.bf16.xpose.msra.mxu0 0
        %1078 = vmatprep.mubr.bf16.mxu0 0
        %1079 = vmatmul.mubr.bf16.gmra.mrb[0].mxu0 %v1041
        %v1080 = vpop.f32.mrb[0].mxu0
        %v1081 = vadd.f32 0.0, %v1080
        %v1082 = vpop.f32.mrb[0].mxu0
        %v1083 = vpop.f32.mrb[0].mxu0
        %v1084 = vadd.f32 0.0, %v1083
        %v1085 = vpop.f32.mrb[0].mxu0
        %1086 = vdwg.mxu0
        %1088 = vrot.lane.b32.xlu0 %v924, 120
        %v1089 = vpop.permute.xlu0 %1088
        %v1091 = vsel %vm638, %v916, 0
        %v1094 = vsel %vm638, %v1089, 0
        %1096 = vmatprep.subr.bf16.mxu0 0
        %1097 = vmatpush1.bf16.xpose.msra.mxu0 %v1094
        %1098 = vmatprep.subr.bf16.mxu0 0
        %1099 = vmatpush1.bf16.xpose.msra.mxu0 0
        %1100 = vmatprep.subr.bf16.mxu0 0
        %1101 = vmatpush1.bf16.xpose.msra.mxu0 0
        %1102 = vmatprep.subr.bf16.mxu0 0
        %1103 = vmatpush1.bf16.xpose.msra.mxu0 0
        %1104 = vmatprep.subr.bf16.mxu0 0
        %1105 = vmatpush1.bf16.xpose.msra.mxu0 0
        %1106 = vmatprep.subr.bf16.mxu0 0
        %1107 = vmatpush1.bf16.xpose.msra.mxu0 0
        %1108 = vmatprep.subr.bf16.mxu0 0
        %1109 = vmatpush1.bf16.xpose.msra.mxu0 0
        %1110 = vmatprep.subr.bf16.mxu0 0
        %1111 = vmatpush1.bf16.xpose.msra.mxu0 0
        %1112 = vmatprep.subr.bf16.mxu0 0
        %1113 = vmatpush1.bf16.xpose.msra.mxu0 0
        %1114 = vmatprep.subr.bf16.mxu0 0
        %1115 = vmatpush1.bf16.xpose.msra.mxu0 0
        %1116 = vmatprep.subr.bf16.mxu0 0
        %1117 = vmatpush1.bf16.xpose.msra.mxu0 0
        %1118 = vmatprep.subr.bf16.mxu0 0
        %1119 = vmatpush1.bf16.xpose.msra.mxu0 0
        %1120 = vmatprep.subr.bf16.mxu0 0
        %1121 = vmatpush1.bf16.xpose.msra.mxu0 0
        %1122 = vmatprep.subr.bf16.mxu0 0
        %1123 = vmatpush1.bf16.xpose.msra.mxu0 0
        %1124 = vmatprep.subr.bf16.mxu0 0
        %1125 = vmatpush1.bf16.xpose.msra.mxu0 0
        %1126 = vmatprep.subr.bf16.mxu0 0
        %1127 = vmatpush1.bf16.xpose.msra.mxu0 0
        %1128 = vmatprep.mubr.bf16.mxu0 0
        %1129 = vmatmul.mubr.bf16.gmra.mrb[0].mxu0 %v1091
        %v1130 = vpop.f32.mrb[0].mxu0
        %v1131 = vadd.f32 0.0, %v1130
        %v1132 = vpop.f32.mrb[0].mxu0
        %v1133 = vpop.f32.mrb[0].mxu0
        %v1134 = vadd.f32 0.0, %v1133
        %v1135 = vpop.f32.mrb[0].mxu0
        %1136 = vdwg.mxu0
        %1138 = vrot.lane.b32.xlu0 %v925, 120
        %v1139 = vpop.permute.xlu0 %1138
        %v1141 = vsel %vm638, %v917, 0
        %v1144 = vsel %vm638, %v1139, 0
        %1146 = vmatprep.subr.bf16.mxu0 0
        %1147 = vmatpush1.bf16.xpose.msra.mxu0 %v1144
        %1148 = vmatprep.subr.bf16.mxu0 0
        %1149 = vmatpush1.bf16.xpose.msra.mxu0 0
        %1150 = vmatprep.subr.bf16.mxu0 0
        %1151 = vmatpush1.bf16.xpose.msra.mxu0 0
        %1152 = vmatprep.subr.bf16.mxu0 0
        %1153 = vmatpush1.bf16.xpose.msra.mxu0 0
        %1154 = vmatprep.subr.bf16.mxu0 0
        %1155 = vmatpush1.bf16.xpose.msra.mxu0 0
        %1156 = vmatprep.subr.bf16.mxu0 0
        %1157 = vmatpush1.bf16.xpose.msra.mxu0 0
        %1158 = vmatprep.subr.bf16.mxu0 0
        %1159 = vmatpush1.bf16.xpose.msra.mxu0 0
        %1160 = vmatprep.subr.bf16.mxu0 0
        %1161 = vmatpush1.bf16.xpose.msra.mxu0 0
        %1162 = vmatprep.subr.bf16.mxu0 0
        %1163 = vmatpush1.bf16.xpose.msra.mxu0 0
        %1164 = vmatprep.subr.bf16.mxu0 0
        %1165 = vmatpush1.bf16.xpose.msra.mxu0 0
        %1166 = vmatprep.subr.bf16.mxu0 0
        %1167 = vmatpush1.bf16.xpose.msra.mxu0 0
        %1168 = vmatprep.subr.bf16.mxu0 0
        %1169 = vmatpush1.bf16.xpose.msra.mxu0 0
        %1170 = vmatprep.subr.bf16.mxu0 0
        %1171 = vmatpush1.bf16.xpose.msra.mxu0 0
        %1172 = vmatprep.subr.bf16.mxu0 0
        %1173 = vmatpush1.bf16.xpose.msra.mxu0 0
        %1174 = vmatprep.subr.bf16.mxu0 0
        %1175 = vmatpush1.bf16.xpose.msra.mxu0 0
        %1176 = vmatprep.subr.bf16.mxu0 0
        %1177 = vmatpush1.bf16.xpose.msra.mxu0 0
        %1178 = vmatprep.mubr.bf16.mxu0 0
        %1179 = vmatmul.mubr.bf16.gmra.mrb[0].mxu0 %v1141
        %v1180 = vpop.f32.mrb[0].mxu0
        %v1181 = vadd.f32 0.0, %v1180
        %v1182 = vpop.f32.mrb[0].mxu0
        %v1183 = vpop.f32.mrb[0].mxu0
        %v1184 = vadd.f32 0.0, %v1183
        %v1185 = vpop.f32.mrb[0].mxu0
        %1186 = vdwg.mxu0
        %1188 = vrot.lane.b32.xlu0 %v926, 120
        %v1189 = vpop.permute.xlu0 %1188
        %v1191 = vsel %vm638, %v918, 0
        %v1194 = vsel %vm638, %v1189, 0
        %1196 = vmatprep.subr.bf16.mxu0 0
        %1197 = vmatpush1.bf16.xpose.msra.mxu0 %v1194
        %1198 = vmatprep.subr.bf16.mxu0 0
        %1199 = vmatpush1.bf16.xpose.msra.mxu0 0
        %1200 = vmatprep.subr.bf16.mxu0 0
        %1201 = vmatpush1.bf16.xpose.msra.mxu0 0
        %1202 = vmatprep.subr.bf16.mxu0 0
        %1203 = vmatpush1.bf16.xpose.msra.mxu0 0
        %1204 = vmatprep.subr.bf16.mxu0 0
        %1205 = vmatpush1.bf16.xpose.msra.mxu0 0
        %1206 = vmatprep.subr.bf16.mxu0 0
        %1207 = vmatpush1.bf16.xpose.msra.mxu0 0
        %1208 = vmatprep.subr.bf16.mxu0 0
        %1209 = vmatpush1.bf16.xpose.msra.mxu0 0
        %1210 = vmatprep.subr.bf16.mxu0 0
        %1211 = vmatpush1.bf16.xpose.msra.mxu0 0
        %1212 = vmatprep.subr.bf16.mxu0 0
        %1213 = vmatpush1.bf16.xpose.msra.mxu0 0
        %1214 = vmatprep.subr.bf16.mxu0 0
        %1215 = vmatpush1.bf16.xpose.msra.mxu0 0
        %1216 = vmatprep.subr.bf16.mxu0 0
        %1217 = vmatpush1.bf16.xpose.msra.mxu0 0
        %1218 = vmatprep.subr.bf16.mxu0 0
        %1219 = vmatpush1.bf16.xpose.msra.mxu0 0
        %1220 = vmatprep.subr.bf16.mxu0 0
        %1221 = vmatpush1.bf16.xpose.msra.mxu0 0
        %1222 = vmatprep.subr.bf16.mxu0 0
        %1223 = vmatpush1.bf16.xpose.msra.mxu0 0
        %1224 = vmatprep.subr.bf16.mxu0 0
        %1225 = vmatpush1.bf16.xpose.msra.mxu0 0
        %1226 = vmatprep.subr.bf16.mxu0 0
        %1227 = vmatpush1.bf16.xpose.msra.mxu0 0
        %1228 = vmatprep.mubr.bf16.mxu0 0
        %1229 = vmatmul.mubr.bf16.gmra.mrb[0].mxu0 %v1191
        %v1230 = vpop.f32.mrb[0].mxu0
        %v1231 = vadd.f32 0.0, %v1230
        %v1232 = vpop.f32.mrb[0].mxu0
        %v1233 = vpop.f32.mrb[0].mxu0
        %v1234 = vadd.f32 0.0, %v1233
        %v1235 = vpop.f32.mrb[0].mxu0
        %1236 = vdwg.mxu0
        %1238 = vrot.lane.b32.xlu0 %v927, 120
        %v1239 = vpop.permute.xlu0 %1238
        %v1241 = vsel %vm638, %v919, 0
        %v1244 = vsel %vm638, %v1239, 0
        %1246 = vmatprep.subr.bf16.mxu0 0
        %1247 = vmatpush1.bf16.xpose.msra.mxu0 %v1244
        %1248 = vmatprep.subr.bf16.mxu0 0
        %1249 = vmatpush1.bf16.xpose.msra.mxu0 0
        %1250 = vmatprep.subr.bf16.mxu0 0
        %1251 = vmatpush1.bf16.xpose.msra.mxu0 0
        %1252 = vmatprep.subr.bf16.mxu0 0
        %1253 = vmatpush1.bf16.xpose.msra.mxu0 0
        %1254 = vmatprep.subr.bf16.mxu0 0
        %1255 = vmatpush1.bf16.xpose.msra.mxu0 0
        %1256 = vmatprep.subr.bf16.mxu0 0
        %1257 = vmatpush1.bf16.xpose.msra.mxu0 0
        %1258 = vmatprep.subr.bf16.mxu0 0
        %1259 = vmatpush1.bf16.xpose.msra.mxu0 0
        %1260 = vmatprep.subr.bf16.mxu0 0
        %1261 = vmatpush1.bf16.xpose.msra.mxu0 0
        %1262 = vmatprep.subr.bf16.mxu0 0
        %1263 = vmatpush1.bf16.xpose.msra.mxu0 0
        %1264 = vmatprep.subr.bf16.mxu0 0
        %1265 = vmatpush1.bf16.xpose.msra.mxu0 0
        %1266 = vmatprep.subr.bf16.mxu0 0
        %1267 = vmatpush1.bf16.xpose.msra.mxu0 0
        %1268 = vmatprep.subr.bf16.mxu0 0
        %1269 = vmatpush1.bf16.xpose.msra.mxu0 0
        %1270 = vmatprep.subr.bf16.mxu0 0
        %1271 = vmatpush1.bf16.xpose.msra.mxu0 0
        %1272 = vmatprep.subr.bf16.mxu0 0
        %1273 = vmatpush1.bf16.xpose.msra.mxu0 0
        %1274 = vmatprep.subr.bf16.mxu0 0
        %1275 = vmatpush1.bf16.xpose.msra.mxu0 0
        %1276 = vmatprep.subr.bf16.mxu0 0
        %1277 = vmatpush1.bf16.xpose.msra.mxu0 0
        %1278 = vmatprep.mubr.bf16.mxu0 0
        %1279 = vmatmul.mubr.bf16.gmra.mrb[0].mxu0 %v1241
        %v1280 = vpop.f32.mrb[0].mxu0
        %v1281 = vadd.f32 0.0, %v1280
        %v1282 = vpop.f32.mrb[0].mxu0
        %v1283 = vpop.f32.mrb[0].mxu0
        %v1284 = vadd.f32 0.0, %v1283
        %v1285 = vpop.f32.mrb[0].mxu0
        %1286 = vdwg.mxu0
        %1288 = vrot.lane.b32.xlu0 %v928, 120
        %v1289 = vpop.permute.xlu0 %1288
        %v1291 = vsel %vm638, %v920, 0
        %v1294 = vsel %vm638, %v1289, 0
        %1296 = vmatprep.subr.bf16.mxu0 0
        %1297 = vmatpush1.bf16.xpose.msra.mxu0 %v1294
        %1298 = vmatprep.subr.bf16.mxu0 0
        %1299 = vmatpush1.bf16.xpose.msra.mxu0 0
        %1300 = vmatprep.subr.bf16.mxu0 0
        %1301 = vmatpush1.bf16.xpose.msra.mxu0 0
        %1302 = vmatprep.subr.bf16.mxu0 0
        %1303 = vmatpush1.bf16.xpose.msra.mxu0 0
        %1304 = vmatprep.subr.bf16.mxu0 0
        %1305 = vmatpush1.bf16.xpose.msra.mxu0 0
        %1306 = vmatprep.subr.bf16.mxu0 0
        %1307 = vmatpush1.bf16.xpose.msra.mxu0 0
        %1308 = vmatprep.subr.bf16.mxu0 0
        %1309 = vmatpush1.bf16.xpose.msra.mxu0 0
        %1310 = vmatprep.subr.bf16.mxu0 0
        %1311 = vmatpush1.bf16.xpose.msra.mxu0 0
        %1312 = vmatprep.subr.bf16.mxu0 0
        %1313 = vmatpush1.bf16.xpose.msra.mxu0 0
        %1314 = vmatprep.subr.bf16.mxu0 0
        %1315 = vmatpush1.bf16.xpose.msra.mxu0 0
        %1316 = vmatprep.subr.bf16.mxu0 0
        %1317 = vmatpush1.bf16.xpose.msra.mxu0 0
        %1318 = vmatprep.subr.bf16.mxu0 0
        %1319 = vmatpush1.bf16.xpose.msra.mxu0 0
        %1320 = vmatprep.subr.bf16.mxu0 0
        %1321 = vmatpush1.bf16.xpose.msra.mxu0 0
        %1322 = vmatprep.subr.bf16.mxu0 0
        %1323 = vmatpush1.bf16.xpose.msra.mxu0 0
        %1324 = vmatprep.subr.bf16.mxu0 0
        %1325 = vmatpush1.bf16.xpose.msra.mxu0 0
        %1326 = vmatprep.subr.bf16.mxu0 0
        %1327 = vmatpush1.bf16.xpose.msra.mxu0 0
        %1328 = vmatprep.mubr.bf16.mxu0 0
        %1329 = vmatmul.mubr.bf16.gmra.mrb[0].mxu0 %v1291
        %v1330 = vpop.f32.mrb[0].mxu0
        %v1331 = vadd.f32 0.0, %v1330
        %v1332 = vpop.f32.mrb[0].mxu0
        %v1333 = vpop.f32.mrb[0].mxu0
        %v1334 = vadd.f32 0.0, %v1333
        %v1335 = vpop.f32.mrb[0].mxu0
        %1336 = vdwg.mxu0
        %v1337 = vld [vmem:[%s322] sm:$0xff]
        %v1338 = vld [vmem:[%s322 + $0x8] sm:$0xff]
        %v1339 = vld [vmem:[%s322 + $0x10] sm:$0xff]
        %v1340 = vld [vmem:[%s322 + $0x18] sm:$0xff]
        %v1341 = vld [vmem:[%s322 + $0x20] sm:$0xff]
        %v1342 = vld [vmem:[%s322 + $0x28] sm:$0xff]
        %v1343 = vld [vmem:[%s322 + $0x30] sm:$0xff]
        %v1344 = vld [vmem:[%s322 + $0x38] sm:$0xff]
        %v1345 = vadd.f32 %v981, %v1337
        %v1346 = vadd.f32 %v984, %v1338
        %v1347 = vadd.f32 %v1031, %v1339
        %v1348 = vadd.f32 %v1034, %v1340
        %v1349 = vadd.f32 %v1081, %v1341
        %v1350 = vadd.f32 %v1084, %v1342
        %v1351 = vadd.f32 %v1131, %v1343
        %v1352 = vadd.f32 %v1134, %v1344
        %v1353 = vadd.f32 %v1181, %v1337
        %v1354 = vadd.f32 %v1184, %v1338
        %v1355 = vadd.f32 %v1231, %v1339
        %v1356 = vadd.f32 %v1234, %v1340
        %v1357 = vadd.f32 %v1281, %v1341
        %v1358 = vadd.f32 %v1284, %v1342
        %v1359 = vadd.f32 %v1331, %v1343
        %v1360 = vadd.f32 %v1334, %v1344
        %vm1361 = vcmask 130048
        %v1362 = vsel %vm1361, %v1345, -inf
        %1363 = vmax.xlane.f32.xlu0 %v1362
        %v1364 = vpop.xlane.xlu0 %1363
        %v1365 = vsel %vm1361, %v1346, -inf
        %1366 = vmax.xlane.f32.xlu0 %v1365
        %v1367 = vpop.xlane.xlu0 %1366
        %v1368 = vsel %vm1361, %v1347, -inf
        %1369 = vmax.xlane.f32.xlu0 %v1368
        %v1370 = vpop.xlane.xlu0 %1369
        %v1371 = vsel %vm1361, %v1348, -inf
        %1372 = vmax.xlane.f32.xlu0 %v1371
        %v1373 = vpop.xlane.xlu0 %1372
        %v1374 = vsel %vm1361, %v1349, -inf
        %1375 = vmax.xlane.f32.xlu0 %v1374
        %v1376 = vpop.xlane.xlu0 %1375
        %v1377 = vsel %vm1361, %v1350, -inf
        %1378 = vmax.xlane.f32.xlu0 %v1377
        %v1379 = vpop.xlane.xlu0 %1378
        %v1380 = vsel %vm1361, %v1351, -inf
        %1381 = vmax.xlane.f32.xlu0 %v1380
        %v1382 = vpop.xlane.xlu0 %1381
        %v1383 = vsel %vm1361, %v1352, -inf
        %1384 = vmax.xlane.f32.xlu0 %v1383
        %v1385 = vpop.xlane.xlu0 %1384
        %v1386 = vsel %vm1361, %v1353, -inf
        %1387 = vmax.xlane.f32.xlu0 %v1386
        %v1388 = vpop.xlane.xlu0 %1387
        %v1389 = vsel %vm1361, %v1354, -inf
        %1390 = vmax.xlane.f32.xlu0 %v1389
        %v1391 = vpop.xlane.xlu0 %1390
        %v1392 = vsel %vm1361, %v1355, -inf
        %1393 = vmax.xlane.f32.xlu0 %v1392
        %v1394 = vpop.xlane.xlu0 %1393
        %v1395 = vsel %vm1361, %v1356, -inf
        %1396 = vmax.xlane.f32.xlu0 %v1395
        %v1397 = vpop.xlane.xlu0 %1396
        %v1398 = vsel %vm1361, %v1357, -inf
        %1399 = vmax.xlane.f32.xlu0 %v1398
        %v1400 = vpop.xlane.xlu0 %1399
        %v1401 = vsel %vm1361, %v1358, -inf
        %1402 = vmax.xlane.f32.xlu0 %v1401
        %v1403 = vpop.xlane.xlu0 %1402
        %v1404 = vsel %vm1361, %v1359, -inf
        %1405 = vmax.xlane.f32.xlu0 %v1404
        %v1406 = vpop.xlane.xlu0 %1405
        %v1407 = vsel %vm1361, %v1360, -inf
        %1408 = vmax.xlane.f32.xlu0 %v1407
        %v1409 = vpop.xlane.xlu0 %1408
        %v1410 = vsub.f32 %v1345, %v1364
        %v1411 = vsub.f32 %v1346, %v1367
        %v1412 = vsub.f32 %v1347, %v1370
        %v1413 = vsub.f32 %v1348, %v1373
        %v1414 = vsub.f32 %v1349, %v1376
        %v1415 = vsub.f32 %v1350, %v1379
        %v1416 = vsub.f32 %v1351, %v1382
        %v1417 = vsub.f32 %v1352, %v1385
        %v1418 = vsub.f32 %v1353, %v1388
        %v1419 = vsub.f32 %v1354, %v1391
        %v1420 = vsub.f32 %v1355, %v1394
        %v1421 = vsub.f32 %v1356, %v1397
        %v1422 = vsub.f32 %v1357, %v1400
        %v1423 = vsub.f32 %v1358, %v1403
        %v1424 = vsub.f32 %v1359, %v1406
        %v1425 = vsub.f32 %v1360, %v1409
        %v1426 = vmul.f32 %v1410, 1.442695
        %v1427 = vpow.pop %v1426
        %v1428 = vmul.f32 %v1411, 1.442695
        %v1429 = vpow.pop %v1428
        %v1430 = vmul.f32 %v1412, 1.442695
        %v1431 = vpow.pop %v1430
        %v1432 = vmul.f32 %v1413, 1.442695
        %v1433 = vpow.pop %v1432
        %v1434 = vmul.f32 %v1414, 1.442695
        %v1435 = vpow.pop %v1434
        %v1436 = vmul.f32 %v1415, 1.442695
        %v1437 = vpow.pop %v1436
        %v1438 = vmul.f32 %v1416, 1.442695
        %v1439 = vpow.pop %v1438
        %v1440 = vmul.f32 %v1417, 1.442695
        %v1441 = vpow.pop %v1440
        %v1442 = vmul.f32 %v1418, 1.442695
        %v1443 = vpow.pop %v1442
        %v1444 = vmul.f32 %v1419, 1.442695
        %v1445 = vpow.pop %v1444
        %v1446 = vmul.f32 %v1420, 1.442695
        %v1447 = vpow.pop %v1446
        %v1448 = vmul.f32 %v1421, 1.442695
        %v1449 = vpow.pop %v1448
        %v1450 = vmul.f32 %v1422, 1.442695
        %v1451 = vpow.pop %v1450
        %v1452 = vmul.f32 %v1423, 1.442695
        %v1453 = vpow.pop %v1452
        %v1454 = vmul.f32 %v1424, 1.442695
        %v1455 = vpow.pop %v1454
        %v1456 = vmul.f32 %v1425, 1.442695
        %v1457 = vpow.pop %v1456
        %v1458 = vsel %vm1361, %v1427, 0.0
        %1459 = vadd.xlane.f32.xlu0 %v1458
        %v1460 = vpop.xlane.xlu0 %1459
        %v1461 = vsel %vm1361, %v1429, 0.0
        %1462 = vadd.xlane.f32.xlu0 %v1461
        %v1463 = vpop.xlane.xlu0 %1462
        %v1464 = vsel %vm1361, %v1431, 0.0
        %1465 = vadd.xlane.f32.xlu0 %v1464
        %v1466 = vpop.xlane.xlu0 %1465
        %v1467 = vsel %vm1361, %v1433, 0.0
        %1468 = vadd.xlane.f32.xlu0 %v1467
        %v1469 = vpop.xlane.xlu0 %1468
        %v1470 = vsel %vm1361, %v1435, 0.0
        %1471 = vadd.xlane.f32.xlu0 %v1470
        %v1472 = vpop.xlane.xlu0 %1471
        %v1473 = vsel %vm1361, %v1437, 0.0
        %1474 = vadd.xlane.f32.xlu0 %v1473
        %v1475 = vpop.xlane.xlu0 %1474
        %v1476 = vsel %vm1361, %v1439, 0.0
        %1477 = vadd.xlane.f32.xlu0 %v1476
        %v1478 = vpop.xlane.xlu0 %1477
        %v1479 = vsel %vm1361, %v1441, 0.0
        %1480 = vadd.xlane.f32.xlu0 %v1479
        %v1481 = vpop.xlane.xlu0 %1480
        %v1482 = vsel %vm1361, %v1443, 0.0
        %1483 = vadd.xlane.f32.xlu0 %v1482
        %v1484 = vpop.xlane.xlu0 %1483
        %v1485 = vsel %vm1361, %v1445, 0.0
        %1486 = vadd.xlane.f32.xlu0 %v1485
        %v1487 = vpop.xlane.xlu0 %1486
        %v1488 = vsel %vm1361, %v1447, 0.0
        %1489 = vadd.xlane.f32.xlu0 %v1488
        %v1490 = vpop.xlane.xlu0 %1489
        %v1491 = vsel %vm1361, %v1449, 0.0
        %1492 = vadd.xlane.f32.xlu0 %v1491
        %v1493 = vpop.xlane.xlu0 %1492
        %v1494 = vsel %vm1361, %v1451, 0.0
        %1495 = vadd.xlane.f32.xlu0 %v1494
        %v1496 = vpop.xlane.xlu0 %1495
        %v1497 = vsel %vm1361, %v1453, 0.0
        %1498 = vadd.xlane.f32.xlu0 %v1497
        %v1499 = vpop.xlane.xlu0 %1498
        %v1500 = vsel %vm1361, %v1455, 0.0
        %1501 = vadd.xlane.f32.xlu0 %v1500
        %v1502 = vpop.xlane.xlu0 %1501
        %v1503 = vsel %vm1361, %v1457, 0.0
        %1504 = vadd.xlane.f32.xlu0 %v1503
        %v1505 = vpop.xlane.xlu0 %1504
        %v1506 = vrcp.pop %v1460
        %v1507 = vrcp.pop %v1463
        %v1508 = vrcp.pop %v1466
        %v1509 = vrcp.pop %v1469
        %v1510 = vrcp.pop %v1472
        %v1511 = vrcp.pop %v1475
        %v1512 = vrcp.pop %v1478
        %v1513 = vrcp.pop %v1481
        %v1514 = vrcp.pop %v1484
        %v1515 = vrcp.pop %v1487
        %v1516 = vrcp.pop %v1490
        %v1517 = vrcp.pop %v1493
        %v1518 = vrcp.pop %v1496
        %v1519 = vrcp.pop %v1499
        %v1520 = vrcp.pop %v1502
        %v1521 = vrcp.pop %v1505
        %v1522 = vmul.f32 %v1427, %v1506
        %v1523 = vmul.f32 %v1429, %v1507
        %v1524 = vmul.f32 %v1431, %v1508
        %v1525 = vmul.f32 %v1433, %v1509
        %v1526 = vmul.f32 %v1435, %v1510
        %v1527 = vmul.f32 %v1437, %v1511
        %v1528 = vmul.f32 %v1439, %v1512
        %v1529 = vmul.f32 %v1441, %v1513
        %v1530 = vmul.f32 %v1443, %v1514
        %v1531 = vmul.f32 %v1445, %v1515
        %v1532 = vmul.f32 %v1447, %v1516
        %v1533 = vmul.f32 %v1449, %v1517
        %v1534 = vmul.f32 %v1451, %v1518
        %v1535 = vmul.f32 %v1453, %v1519
        %v1536 = vmul.f32 %v1455, %v1520
        %v1537 = vmul.f32 %v1457, %v1521
        %v1538 = vpack.c.bf16 %v1523, %v1522
        %v1539 = vpack.c.bf16 %v1525, %v1524
        %v1540 = vpack.c.bf16 %v1527, %v1526
        %v1541 = vpack.c.bf16 %v1529, %v1528
        %v1542 = vpack.c.bf16 %v1531, %v1530
        %v1543 = vpack.c.bf16 %v1533, %v1532
        %v1544 = vpack.c.bf16 %v1535, %v1534
        %v1545 = vpack.c.bf16 %v1537, %v1536
        %1547 = vrot.lane.b32.xlu0 %v929, 112
        %v1548 = vpop.permute.xlu0 %1547
        %v1551 = vsel %vm1361, %v1538, 0
        %1553 = vmatprep.subr.bf16.mxu0 0
        %1554 = vmatpush1.bf16.msra.mxu0 %v1548
        %1555 = vmatprep.subr.bf16.mxu0 0
        %1556 = vmatpush1.bf16.msra.mxu0 0
        %1557 = vmatprep.subr.bf16.mxu0 0
        %1558 = vmatpush1.bf16.msra.mxu0 0
        %1559 = vmatprep.subr.bf16.mxu0 0
        %1560 = vmatpush1.bf16.msra.mxu0 0
        %1561 = vmatprep.subr.bf16.mxu0 0
        %1562 = vmatpush1.bf16.msra.mxu0 0
        %1563 = vmatprep.subr.bf16.mxu0 0
        %1564 = vmatpush1.bf16.msra.mxu0 0
        %1565 = vmatprep.subr.bf16.mxu0 0
        %1566 = vmatpush1.bf16.msra.mxu0 0
        %1567 = vmatprep.subr.bf16.mxu0 0
        %1568 = vmatpush1.bf16.msra.mxu0 0
        %1569 = vmatprep.subr.bf16.mxu0 0
        %1570 = vmatpush1.bf16.msra.mxu0 0
        %1571 = vmatprep.subr.bf16.mxu0 0
        %1572 = vmatpush1.bf16.msra.mxu0 0
        %1573 = vmatprep.subr.bf16.mxu0 0
        %1574 = vmatpush1.bf16.msra.mxu0 0
        %1575 = vmatprep.subr.bf16.mxu0 0
        %1576 = vmatpush1.bf16.msra.mxu0 0
        %1577 = vmatprep.subr.bf16.mxu0 0
        %1578 = vmatpush1.bf16.msra.mxu0 0
        %1579 = vmatprep.subr.bf16.mxu0 0
        %1580 = vmatpush1.bf16.msra.mxu0 0
        %1581 = vmatprep.subr.bf16.mxu0 0
        %1582 = vmatpush1.bf16.msra.mxu0 0
        %1583 = vmatprep.subr.bf16.mxu0 0
        %1584 = vmatpush1.bf16.msra.mxu0 0
        %1585 = vmatprep.mubr.bf16.mxu0 0
        %1586 = vmatmul.mubr.bf16.gmra.mrb[0].mxu0 %v1551
        %v1587 = vpop.f32.mrb[0].mxu0
        %v1588 = vadd.f32 0.0, %v1587
        %v1589 = vpop.f32.mrb[0].mxu0
        %v1590 = vpop.f32.mrb[0].mxu0
        %v1591 = vadd.f32 0.0, %v1590
        %v1592 = vpop.f32.mrb[0].mxu0
        %1593 = vdwg.mxu0
        %1595 = vrot.lane.b32.xlu0 %v930, 112
        %v1596 = vpop.permute.xlu0 %1595
        %v1599 = vsel %vm1361, %v1539, 0
        %1601 = vmatprep.subr.bf16.mxu0 0
        %1602 = vmatpush1.bf16.msra.mxu0 %v1596
        %1603 = vmatprep.subr.bf16.mxu0 0
        %1604 = vmatpush1.bf16.msra.mxu0 0
        %1605 = vmatprep.subr.bf16.mxu0 0
        %1606 = vmatpush1.bf16.msra.mxu0 0
        %1607 = vmatprep.subr.bf16.mxu0 0
        %1608 = vmatpush1.bf16.msra.mxu0 0
        %1609 = vmatprep.subr.bf16.mxu0 0
        %1610 = vmatpush1.bf16.msra.mxu0 0
        %1611 = vmatprep.subr.bf16.mxu0 0
        %1612 = vmatpush1.bf16.msra.mxu0 0
        %1613 = vmatprep.subr.bf16.mxu0 0
        %1614 = vmatpush1.bf16.msra.mxu0 0
        %1615 = vmatprep.subr.bf16.mxu0 0
        %1616 = vmatpush1.bf16.msra.mxu0 0
        %1617 = vmatprep.subr.bf16.mxu0 0
        %1618 = vmatpush1.bf16.msra.mxu0 0
        %1619 = vmatprep.subr.bf16.mxu0 0
        %1620 = vmatpush1.bf16.msra.mxu0 0
        %1621 = vmatprep.subr.bf16.mxu0 0
        %1622 = vmatpush1.bf16.msra.mxu0 0
        %1623 = vmatprep.subr.bf16.mxu0 0
        %1624 = vmatpush1.bf16.msra.mxu0 0
        %1625 = vmatprep.subr.bf16.mxu0 0
        %1626 = vmatpush1.bf16.msra.mxu0 0
        %1627 = vmatprep.subr.bf16.mxu0 0
        %1628 = vmatpush1.bf16.msra.mxu0 0
        %1629 = vmatprep.subr.bf16.mxu0 0
        %1630 = vmatpush1.bf16.msra.mxu0 0
        %1631 = vmatprep.subr.bf16.mxu0 0
        %1632 = vmatpush1.bf16.msra.mxu0 0
        %1633 = vmatprep.mubr.bf16.mxu0 0
        %1634 = vmatmul.mubr.bf16.gmra.mrb[0].mxu0 %v1599
        %v1635 = vpop.f32.mrb[0].mxu0
        %v1636 = vadd.f32 0.0, %v1635
        %v1637 = vpop.f32.mrb[0].mxu0
        %v1638 = vpop.f32.mrb[0].mxu0
        %v1639 = vadd.f32 0.0, %v1638
        %v1640 = vpop.f32.mrb[0].mxu0
        %1641 = vdwg.mxu0
        %1643 = vrot.lane.b32.xlu0 %v931, 112
        %v1644 = vpop.permute.xlu0 %1643
        %v1647 = vsel %vm1361, %v1540, 0
        %1649 = vmatprep.subr.bf16.mxu0 0
        %1650 = vmatpush1.bf16.msra.mxu0 %v1644
        %1651 = vmatprep.subr.bf16.mxu0 0
        %1652 = vmatpush1.bf16.msra.mxu0 0
        %1653 = vmatprep.subr.bf16.mxu0 0
        %1654 = vmatpush1.bf16.msra.mxu0 0
        %1655 = vmatprep.subr.bf16.mxu0 0
        %1656 = vmatpush1.bf16.msra.mxu0 0
        %1657 = vmatprep.subr.bf16.mxu0 0
        %1658 = vmatpush1.bf16.msra.mxu0 0
        %1659 = vmatprep.subr.bf16.mxu0 0
        %1660 = vmatpush1.bf16.msra.mxu0 0
        %1661 = vmatprep.subr.bf16.mxu0 0
        %1662 = vmatpush1.bf16.msra.mxu0 0
        %1663 = vmatprep.subr.bf16.mxu0 0
        %1664 = vmatpush1.bf16.msra.mxu0 0
        %1665 = vmatprep.subr.bf16.mxu0 0
        %1666 = vmatpush1.bf16.msra.mxu0 0
        %1667 = vmatprep.subr.bf16.mxu0 0
        %1668 = vmatpush1.bf16.msra.mxu0 0
        %1669 = vmatprep.subr.bf16.mxu0 0
        %1670 = vmatpush1.bf16.msra.mxu0 0
        %1671 = vmatprep.subr.bf16.mxu0 0
        %1672 = vmatpush1.bf16.msra.mxu0 0
        %1673 = vmatprep.subr.bf16.mxu0 0
        %1674 = vmatpush1.bf16.msra.mxu0 0
        %1675 = vmatprep.subr.bf16.mxu0 0
        %1676 = vmatpush1.bf16.msra.mxu0 0
        %1677 = vmatprep.subr.bf16.mxu0 0
        %1678 = vmatpush1.bf16.msra.mxu0 0
        %1679 = vmatprep.subr.bf16.mxu0 0
        %1680 = vmatpush1.bf16.msra.mxu0 0
        %1681 = vmatprep.mubr.bf16.mxu0 0
        %1682 = vmatmul.mubr.bf16.gmra.mrb[0].mxu0 %v1647
        %v1683 = vpop.f32.mrb[0].mxu0
        %v1684 = vadd.f32 0.0, %v1683
        %v1685 = vpop.f32.mrb[0].mxu0
        %v1686 = vpop.f32.mrb[0].mxu0
        %v1687 = vadd.f32 0.0, %v1686
        %v1688 = vpop.f32.mrb[0].mxu0
        %1689 = vdwg.mxu0
        %1691 = vrot.lane.b32.xlu0 %v932, 112
        %v1692 = vpop.permute.xlu0 %1691
        %v1695 = vsel %vm1361, %v1541, 0
        %1697 = vmatprep.subr.bf16.mxu0 0
        %1698 = vmatpush1.bf16.msra.mxu0 %v1692
        %1699 = vmatprep.subr.bf16.mxu0 0
        %1700 = vmatpush1.bf16.msra.mxu0 0
        %1701 = vmatprep.subr.bf16.mxu0 0
        %1702 = vmatpush1.bf16.msra.mxu0 0
        %1703 = vmatprep.subr.bf16.mxu0 0
        %1704 = vmatpush1.bf16.msra.mxu0 0
        %1705 = vmatprep.subr.bf16.mxu0 0
        %1706 = vmatpush1.bf16.msra.mxu0 0
        %1707 = vmatprep.subr.bf16.mxu0 0
        %1708 = vmatpush1.bf16.msra.mxu0 0
        %1709 = vmatprep.subr.bf16.mxu0 0
        %1710 = vmatpush1.bf16.msra.mxu0 0
        %1711 = vmatprep.subr.bf16.mxu0 0
        %1712 = vmatpush1.bf16.msra.mxu0 0
        %1713 = vmatprep.subr.bf16.mxu0 0
        %1714 = vmatpush1.bf16.msra.mxu0 0
        %1715 = vmatprep.subr.bf16.mxu0 0
        %1716 = vmatpush1.bf16.msra.mxu0 0
        %1717 = vmatprep.subr.bf16.mxu0 0
        %1718 = vmatpush1.bf16.msra.mxu0 0
        %1719 = vmatprep.subr.bf16.mxu0 0
        %1720 = vmatpush1.bf16.msra.mxu0 0
        %1721 = vmatprep.subr.bf16.mxu0 0
        %1722 = vmatpush1.bf16.msra.mxu0 0
        %1723 = vmatprep.subr.bf16.mxu0 0
        %1724 = vmatpush1.bf16.msra.mxu0 0
        %1725 = vmatprep.subr.bf16.mxu0 0
        %1726 = vmatpush1.bf16.msra.mxu0 0
        %1727 = vmatprep.subr.bf16.mxu0 0
        %1728 = vmatpush1.bf16.msra.mxu0 0
        %1729 = vmatprep.mubr.bf16.mxu0 0
        %1730 = vmatmul.mubr.bf16.gmra.mrb[0].mxu0 %v1695
        %v1731 = vpop.f32.mrb[0].mxu0
        %v1732 = vadd.f32 0.0, %v1731
        %v1733 = vpop.f32.mrb[0].mxu0
        %v1734 = vpop.f32.mrb[0].mxu0
        %v1735 = vadd.f32 0.0, %v1734
        %v1736 = vpop.f32.mrb[0].mxu0
        %1737 = vdwg.mxu0
        %1739 = vrot.lane.b32.xlu0 %v933, 112
        %v1740 = vpop.permute.xlu0 %1739
        %v1743 = vsel %vm1361, %v1542, 0
        %1745 = vmatprep.subr.bf16.mxu0 0
        %1746 = vmatpush1.bf16.msra.mxu0 %v1740
        %1747 = vmatprep.subr.bf16.mxu0 0
        %1748 = vmatpush1.bf16.msra.mxu0 0
        %1749 = vmatprep.subr.bf16.mxu0 0
        %1750 = vmatpush1.bf16.msra.mxu0 0
        %1751 = vmatprep.subr.bf16.mxu0 0
        %1752 = vmatpush1.bf16.msra.mxu0 0
        %1753 = vmatprep.subr.bf16.mxu0 0
        %1754 = vmatpush1.bf16.msra.mxu0 0
        %1755 = vmatprep.subr.bf16.mxu0 0
        %1756 = vmatpush1.bf16.msra.mxu0 0
        %1757 = vmatprep.subr.bf16.mxu0 0
        %1758 = vmatpush1.bf16.msra.mxu0 0
        %1759 = vmatprep.subr.bf16.mxu0 0
        %1760 = vmatpush1.bf16.msra.mxu0 0
        %1761 = vmatprep.subr.bf16.mxu0 0
        %1762 = vmatpush1.bf16.msra.mxu0 0
        %1763 = vmatprep.subr.bf16.mxu0 0
        %1764 = vmatpush1.bf16.msra.mxu0 0
        %1765 = vmatprep.subr.bf16.mxu0 0
        %1766 = vmatpush1.bf16.msra.mxu0 0
        %1767 = vmatprep.subr.bf16.mxu0 0
        %1768 = vmatpush1.bf16.msra.mxu0 0
        %1769 = vmatprep.subr.bf16.mxu0 0
        %1770 = vmatpush1.bf16.msra.mxu0 0
        %1771 = vmatprep.subr.bf16.mxu0 0
        %1772 = vmatpush1.bf16.msra.mxu0 0
        %1773 = vmatprep.subr.bf16.mxu0 0
        %1774 = vmatpush1.bf16.msra.mxu0 0
        %1775 = vmatprep.subr.bf16.mxu0 0
        %1776 = vmatpush1.bf16.msra.mxu0 0
        %1777 = vmatprep.mubr.bf16.mxu0 0
        %1778 = vmatmul.mubr.bf16.gmra.mrb[0].mxu0 %v1743
        %v1779 = vpop.f32.mrb[0].mxu0
        %v1780 = vadd.f32 0.0, %v1779
        %v1781 = vpop.f32.mrb[0].mxu0
        %v1782 = vpop.f32.mrb[0].mxu0
        %v1783 = vadd.f32 0.0, %v1782
        %v1784 = vpop.f32.mrb[0].mxu0
        %1785 = vdwg.mxu0
        %1787 = vrot.lane.b32.xlu0 %v934, 112
        %v1788 = vpop.permute.xlu0 %1787
        %v1791 = vsel %vm1361, %v1543, 0
        %1793 = vmatprep.subr.bf16.mxu0 0
        %1794 = vmatpush1.bf16.msra.mxu0 %v1788
        %1795 = vmatprep.subr.bf16.mxu0 0
        %1796 = vmatpush1.bf16.msra.mxu0 0
        %1797 = vmatprep.subr.bf16.mxu0 0
        %1798 = vmatpush1.bf16.msra.mxu0 0
        %1799 = vmatprep.subr.bf16.mxu0 0
        %1800 = vmatpush1.bf16.msra.mxu0 0
        %1801 = vmatprep.subr.bf16.mxu0 0
        %1802 = vmatpush1.bf16.msra.mxu0 0
        %1803 = vmatprep.subr.bf16.mxu0 0
        %1804 = vmatpush1.bf16.msra.mxu0 0
        %1805 = vmatprep.subr.bf16.mxu0 0
        %1806 = vmatpush1.bf16.msra.mxu0 0
        %1807 = vmatprep.subr.bf16.mxu0 0
        %1808 = vmatpush1.bf16.msra.mxu0 0
        %1809 = vmatprep.subr.bf16.mxu0 0
        %1810 = vmatpush1.bf16.msra.mxu0 0
        %1811 = vmatprep.subr.bf16.mxu0 0
        %1812 = vmatpush1.bf16.msra.mxu0 0
        %1813 = vmatprep.subr.bf16.mxu0 0
        %1814 = vmatpush1.bf16.msra.mxu0 0
        %1815 = vmatprep.subr.bf16.mxu0 0
        %1816 = vmatpush1.bf16.msra.mxu0 0
        %1817 = vmatprep.subr.bf16.mxu0 0
        %1818 = vmatpush1.bf16.msra.mxu0 0
        %1819 = vmatprep.subr.bf16.mxu0 0
        %1820 = vmatpush1.bf16.msra.mxu0 0
        %1821 = vmatprep.subr.bf16.mxu0 0
        %1822 = vmatpush1.bf16.msra.mxu0 0
        %1823 = vmatprep.subr.bf16.mxu0 0
        %1824 = vmatpush1.bf16.msra.mxu0 0
        %1825 = vmatprep.mubr.bf16.mxu0 0
        %1826 = vmatmul.mubr.bf16.gmra.mrb[0].mxu0 %v1791
        %v1827 = vpop.f32.mrb[0].mxu0
        %v1828 = vadd.f32 0.0, %v1827
        %v1829 = vpop.f32.mrb[0].mxu0
        %v1830 = vpop.f32.mrb[0].mxu0
        %v1831 = vadd.f32 0.0, %v1830
        %v1832 = vpop.f32.mrb[0].mxu0
        %1833 = vdwg.mxu0
        %1835 = vrot.lane.b32.xlu0 %v935, 112
        %v1836 = vpop.permute.xlu0 %1835
        %v1839 = vsel %vm1361, %v1544, 0
        %1841 = vmatprep.subr.bf16.mxu0 0
        %1842 = vmatpush1.bf16.msra.mxu0 %v1836
        %1843 = vmatprep.subr.bf16.mxu0 0
        %1844 = vmatpush1.bf16.msra.mxu0 0
        %1845 = vmatprep.subr.bf16.mxu0 0
        %1846 = vmatpush1.bf16.msra.mxu0 0
        %1847 = vmatprep.subr.bf16.mxu0 0
        %1848 = vmatpush1.bf16.msra.mxu0 0
        %1849 = vmatprep.subr.bf16.mxu0 0
        %1850 = vmatpush1.bf16.msra.mxu0 0
        %1851 = vmatprep.subr.bf16.mxu0 0
        %1852 = vmatpush1.bf16.msra.mxu0 0
        %1853 = vmatprep.subr.bf16.mxu0 0
        %1854 = vmatpush1.bf16.msra.mxu0 0
        %1855 = vmatprep.subr.bf16.mxu0 0
        %1856 = vmatpush1.bf16.msra.mxu0 0
        %1857 = vmatprep.subr.bf16.mxu0 0
        %1858 = vmatpush1.bf16.msra.mxu0 0
        %1859 = vmatprep.subr.bf16.mxu0 0
        %1860 = vmatpush1.bf16.msra.mxu0 0
        %1861 = vmatprep.subr.bf16.mxu0 0
        %1862 = vmatpush1.bf16.msra.mxu0 0
        %1863 = vmatprep.subr.bf16.mxu0 0
        %1864 = vmatpush1.bf16.msra.mxu0 0
        %1865 = vmatprep.subr.bf16.mxu0 0
        %1866 = vmatpush1.bf16.msra.mxu0 0
        %1867 = vmatprep.subr.bf16.mxu0 0
        %1868 = vmatpush1.bf16.msra.mxu0 0
        %1869 = vmatprep.subr.bf16.mxu0 0
        %1870 = vmatpush1.bf16.msra.mxu0 0
        %1871 = vmatprep.subr.bf16.mxu0 0
        %1872 = vmatpush1.bf16.msra.mxu0 0
        %1873 = vmatprep.mubr.bf16.mxu0 0
        %1874 = vmatmul.mubr.bf16.gmra.mrb[0].mxu0 %v1839
        %v1875 = vpop.f32.mrb[0].mxu0
        %v1876 = vadd.f32 0.0, %v1875
        %v1877 = vpop.f32.mrb[0].mxu0
        %v1878 = vpop.f32.mrb[0].mxu0
        %v1879 = vadd.f32 0.0, %v1878
        %v1880 = vpop.f32.mrb[0].mxu0
        %1881 = vdwg.mxu0
        %1883 = vrot.lane.b32.xlu0 %v936, 112
        %v1884 = vpop.permute.xlu0 %1883
        %v1887 = vsel %vm1361, %v1545, 0
        %1889 = vmatprep.subr.bf16.mxu0 0
        %1890 = vmatpush1.bf16.msra.mxu0 %v1884
        %1891 = vmatprep.subr.bf16.mxu0 0
        %1892 = vmatpush1.bf16.msra.mxu0 0
        %1893 = vmatprep.subr.bf16.mxu0 0
        %1894 = vmatpush1.bf16.msra.mxu0 0
        %1895 = vmatprep.subr.bf16.mxu0 0
        %1896 = vmatpush1.bf16.msra.mxu0 0
        %1897 = vmatprep.subr.bf16.mxu0 0
        %1898 = vmatpush1.bf16.msra.mxu0 0
        %1899 = vmatprep.subr.bf16.mxu0 0
        %1900 = vmatpush1.bf16.msra.mxu0 0
        %1901 = vmatprep.subr.bf16.mxu0 0
        %1902 = vmatpush1.bf16.msra.mxu0 0
        %1903 = vmatprep.subr.bf16.mxu0 0
        %1904 = vmatpush1.bf16.msra.mxu0 0
        %1905 = vmatprep.subr.bf16.mxu0 0
        %1906 = vmatpush1.bf16.msra.mxu0 0
        %1907 = vmatprep.subr.bf16.mxu0 0
        %1908 = vmatpush1.bf16.msra.mxu0 0
        %1909 = vmatprep.subr.bf16.mxu0 0
        %1910 = vmatpush1.bf16.msra.mxu0 0
        %1911 = vmatprep.subr.bf16.mxu0 0
        %1912 = vmatpush1.bf16.msra.mxu0 0
        %1913 = vmatprep.subr.bf16.mxu0 0
        %1914 = vmatpush1.bf16.msra.mxu0 0
        %1915 = vmatprep.subr.bf16.mxu0 0
        %1916 = vmatpush1.bf16.msra.mxu0 0
        %1917 = vmatprep.subr.bf16.mxu0 0
        %1918 = vmatpush1.bf16.msra.mxu0 0
        %1919 = vmatprep.subr.bf16.mxu0 0
        %1920 = vmatpush1.bf16.msra.mxu0 0
        %1921 = vmatprep.mubr.bf16.mxu0 0
        %1922 = vmatmul.mubr.bf16.gmra.mrb[0].mxu0 %v1887
        %v1923 = vpop.f32.mrb[0].mxu0
        %v1924 = vadd.f32 0.0, %v1923
        %v1925 = vpop.f32.mrb[0].mxu0
        %v1926 = vpop.f32.mrb[0].mxu0
        %v1927 = vadd.f32 0.0, %v1926
        %v1928 = vpop.f32.mrb[0].mxu0
        %1929 = vdwg.mxu0
        %v1930 = vld [vmem:[#allocation2] sm:$0xff]
        %v1931 = vld [vmem:[#allocation2 + $0x8] sm:$0xff]
        %v1932 = vld [vmem:[#allocation2 + $0x10] sm:$0xff]
        %v1933 = vld [vmem:[#allocation2 + $0x18] sm:$0xff]
        %v1934 = vld [vmem:[#allocation2 + $0x20] sm:$0xff]
        %v1935 = vld [vmem:[#allocation2 + $0x28] sm:$0xff]
        %v1936 = vld [vmem:[#allocation2 + $0x30] sm:$0xff]
        %v1937 = vld [vmem:[#allocation2 + $0x38] sm:$0xff]
        %v1938 = vld [vmem:[#allocation2 + $0x40] sm:$0xff]
        %v1939 = vld [vmem:[#allocation2 + $0x48] sm:$0xff]
        %v1940 = vld [vmem:[#allocation2 + $0x50] sm:$0xff]
        %v1941 = vld [vmem:[#allocation2 + $0x58] sm:$0xff]
        %v1942 = vld [vmem:[#allocation2 + $0x60] sm:$0xff]
        %v1943 = vld [vmem:[#allocation2 + $0x68] sm:$0xff]
        %v1944 = vld [vmem:[#allocation2 + $0x70] sm:$0xff]
        %v1945 = vld [vmem:[#allocation2 + $0x78] sm:$0xff]
        %v1946 = vpack.c.bf16 %v1591, %v1588
        %v1947 = vpack.c.bf16 %v1639, %v1636
        %v1948 = vpack.c.bf16 %v1687, %v1684
        %v1949 = vpack.c.bf16 %v1735, %v1732
        %v1950 = vpack.c.bf16 %v1783, %v1780
        %v1951 = vpack.c.bf16 %v1831, %v1828
        %v1952 = vpack.c.bf16 %v1879, %v1876
        %v1953 = vpack.c.bf16 %v1927, %v1924
        %v1954 = vld [vmem:[%s392] sm:$0xf]
        %v1956 = vsel %vm638, %v1946, 0
        %v1959 = vsel %vm638, %v1947, 0
        %v1962 = vsel %vm638, %v1948, 0
        %v1965 = vsel %vm638, %v1949, 0
        %v1968 = vsel %vm638, %v1950, 0
        %v1971 = vsel %vm638, %v1951, 0
        %v1974 = vsel %vm638, %v1952, 0
        %v1977 = vsel %vm638, %v1953, 0
        %vm1979 = vcmask 1043456
        %v1981 = vsel %vm1979, %v1954, 0
        %1983 = vmatprep.subr.bf16.mxu0 0
        %1984 = vmatpush1.bf16.msra.mxu0 %v1981
        %1985 = vmatprep.subr.bf16.mxu0 0
        %1986 = vmatpush1.bf16.msra.mxu0 0
        %1987 = vmatprep.subr.bf16.mxu0 0
        %1988 = vmatpush1.bf16.msra.mxu0 0
        %1989 = vmatprep.subr.bf16.mxu0 0
        %1990 = vmatpush1.bf16.msra.mxu0 0
        %1991 = vmatprep.subr.bf16.mxu0 0
        %1992 = vmatpush1.bf16.msra.mxu0 0
        %1993 = vmatprep.subr.bf16.mxu0 0
        %1994 = vmatpush1.bf16.msra.mxu0 0
        %1995 = vmatprep.subr.bf16.mxu0 0
        %1996 = vmatpush1.bf16.msra.mxu0 0
        %1997 = vmatprep.subr.bf16.mxu0 0
        %1998 = vmatpush1.bf16.msra.mxu0 0
        %1999 = vmatprep.subr.bf16.mxu0 0
        %2000 = vmatpush1.bf16.msra.mxu0 0
        %2001 = vmatprep.subr.bf16.mxu0 0
        %2002 = vmatpush1.bf16.msra.mxu0 0
        %2003 = vmatprep.subr.bf16.mxu0 0
        %2004 = vmatpush1.bf16.msra.mxu0 0
        %2005 = vmatprep.subr.bf16.mxu0 0
        %2006 = vmatpush1.bf16.msra.mxu0 0
        %2007 = vmatprep.subr.bf16.mxu0 0
        %2008 = vmatpush1.bf16.msra.mxu0 0
        %2009 = vmatprep.subr.bf16.mxu0 0
        %2010 = vmatpush1.bf16.msra.mxu0 0
        %2011 = vmatprep.subr.bf16.mxu0 0
        %2012 = vmatpush1.bf16.msra.mxu0 0
        %2013 = vmatprep.subr.bf16.mxu0 0
        %2014 = vmatpush1.bf16.msra.mxu0 0
        %2015 = vmatprep.mubr.bf16.mxu0 0
        %2016 = vmatmul.mubr.bf16.gmra.mrb[0].mxu0 %v1956
        %v2017 = vpop.f32.mrb[0].mxu0
        %v2018 = vadd.f32 0.0, %v2017
        %v2019 = vpop.f32.mrb[0].mxu0
        %v2020 = vpop.f32.mrb[0].mxu0
        %v2021 = vadd.f32 0.0, %v2020
        %v2022 = vpop.f32.mrb[0].mxu0
        %2023 = vmatprep.mubr.bf16.mxu0 0
        %2024 = vmatmul.mubr.bf16.gmra.mrb[0].mxu0 %v1959
        %v2025 = vpop.f32.mrb[0].mxu0
        %v2026 = vadd.f32 0.0, %v2025
        %v2027 = vpop.f32.mrb[0].mxu0
        %v2028 = vpop.f32.mrb[0].mxu0
        %v2029 = vadd.f32 0.0, %v2028
        %v2030 = vpop.f32.mrb[0].mxu0
        %2031 = vmatprep.mubr.bf16.mxu0 0
        %2032 = vmatmul.mubr.bf16.gmra.mrb[0].mxu0 %v1962
        %v2033 = vpop.f32.mrb[0].mxu0
        %v2034 = vadd.f32 0.0, %v2033
        %v2035 = vpop.f32.mrb[0].mxu0
        %v2036 = vpop.f32.mrb[0].mxu0
        %v2037 = vadd.f32 0.0, %v2036
        %v2038 = vpop.f32.mrb[0].mxu0
        %2039 = vmatprep.mubr.bf16.mxu0 0
        %2040 = vmatmul.mubr.bf16.gmra.mrb[0].mxu0 %v1965
        %v2041 = vpop.f32.mrb[0].mxu0
        %v2042 = vadd.f32 0.0, %v2041
        %v2043 = vpop.f32.mrb[0].mxu0
        %v2044 = vpop.f32.mrb[0].mxu0
        %v2045 = vadd.f32 0.0, %v2044
        %v2046 = vpop.f32.mrb[0].mxu0
        %2047 = vmatprep.mubr.bf16.mxu0 0
        %2048 = vmatmul.mubr.bf16.gmra.mrb[0].mxu0 %v1968
        %v2049 = vpop.f32.mrb[0].mxu0
        %v2050 = vadd.f32 0.0, %v2049
        %v2051 = vpop.f32.mrb[0].mxu0
        %v2052 = vpop.f32.mrb[0].mxu0
        %v2053 = vadd.f32 0.0, %v2052
        %v2054 = vpop.f32.mrb[0].mxu0
        %2055 = vmatprep.mubr.bf16.mxu0 0
        %2056 = vmatmul.mubr.bf16.gmra.mrb[0].mxu0 %v1971
        %v2057 = vpop.f32.mrb[0].mxu0
        %v2058 = vadd.f32 0.0, %v2057
        %v2059 = vpop.f32.mrb[0].mxu0
        %v2060 = vpop.f32.mrb[0].mxu0
        %v2061 = vadd.f32 0.0, %v2060
        %v2062 = vpop.f32.mrb[0].mxu0
        %2063 = vmatprep.mubr.bf16.mxu0 0
        %2064 = vmatmul.mubr.bf16.gmra.mrb[0].mxu0 %v1974
        %v2065 = vpop.f32.mrb[0].mxu0
        %v2066 = vadd.f32 0.0, %v2065
        %v2067 = vpop.f32.mrb[0].mxu0
        %v2068 = vpop.f32.mrb[0].mxu0
        %v2069 = vadd.f32 0.0, %v2068
        %v2070 = vpop.f32.mrb[0].mxu0
        %2071 = vmatprep.mubr.bf16.mxu0 0
        %2072 = vmatmul.mubr.bf16.gmra.mrb[0].mxu0 %v1977
        %v2073 = vpop.f32.mrb[0].mxu0
        %v2074 = vadd.f32 0.0, %v2073
        %v2075 = vpop.f32.mrb[0].mxu0
        %v2076 = vpop.f32.mrb[0].mxu0
        %v2077 = vadd.f32 0.0, %v2076
        %v2078 = vpop.f32.mrb[0].mxu0
        %2079 = vdwg.mxu0
        %v2080 = vadd.f32 %v1930, %v2018
        %v2081 = vadd.f32 %v1931, %v2021
        %v2082 = vadd.f32 %v1932, %v2026
        %v2083 = vadd.f32 %v1933, %v2029
        %v2084 = vadd.f32 %v1934, %v2034
        %v2085 = vadd.f32 %v1935, %v2037
        %v2086 = vadd.f32 %v1936, %v2042
        %v2087 = vadd.f32 %v1937, %v2045
        %v2088 = vadd.f32 %v1938, %v2050
        %v2089 = vadd.f32 %v1939, %v2053
        %v2090 = vadd.f32 %v1940, %v2058
        %v2091 = vadd.f32 %v1941, %v2061
        %v2092 = vadd.f32 %v1942, %v2066
        %v2093 = vadd.f32 %v1943, %v2069
        %v2094 = vadd.f32 %v1944, %v2074
        %v2095 = vadd.f32 %v1945, %v2077
        %2096 = vst.msk [vmem:[#allocation2] sm:$0xff] %vm500, %v2080
        %2097 = vst.msk [vmem:[#allocation2 + $0x8] sm:$0xff] %vm500, %v2081
        %2098 = vst.msk [vmem:[#allocation2 + $0x10] sm:$0xff] %vm500, %v2082
        %2099 = vst.msk [vmem:[#allocation2 + $0x18] sm:$0xff] %vm500, %v2083
        %2100 = vst.msk [vmem:[#allocation2 + $0x20] sm:$0xff] %vm500, %v2084
        %2101 = vst.msk [vmem:[#allocation2 + $0x28] sm:$0xff] %vm500, %v2085
        %2102 = vst.msk [vmem:[#allocation2 + $0x30] sm:$0xff] %vm500, %v2086
        %2103 = vst.msk [vmem:[#allocation2 + $0x38] sm:$0xff] %vm500, %v2087
        %2104 = vst.msk [vmem:[#allocation2 + $0x40] sm:$0xff] %vm500, %v2088
        %2105 = vst.msk [vmem:[#allocation2 + $0x48] sm:$0xff] %vm500, %v2089
        %2106 = vst.msk [vmem:[#allocation2 + $0x50] sm:$0xff] %vm500, %v2090
        %2107 = vst.msk [vmem:[#allocation2 + $0x58] sm:$0xff] %vm500, %v2091
        %2108 = vst.msk [vmem:[#allocation2 + $0x60] sm:$0xff] %vm500, %v2092
        %2109 = vst.msk [vmem:[#allocation2 + $0x68] sm:$0xff] %vm500, %v2093
        %2110 = vst.msk [vmem:[#allocation2 + $0x70] sm:$0xff] %vm500, %v2094
        %2111 = vst.msk [vmem:[#allocation2 + $0x78] sm:$0xff] %vm500, %v2095
        %p2112 = scmp.eq.s32.totalorder %s27, 3
        // Predicated region
        $region61: #{tpu_custom_call.1} parent=47 // pred_check
          %p2113 = pneg %p2112
        $region62: #{tpu_custom_call.1} parent=47 // pred_check_branch
          %2115 = sbr.rel (%p2113) target = $region64
        $region63: #{tpu_custom_call.1} parent=47 // pred_region
          %v2116 = vld [vmem:[#allocation2] sm:$0xff]
          %v2117 = vld [vmem:[#allocation2 + $0x8] sm:$0xff]
          %v2118 = vld [vmem:[#allocation2 + $0x10] sm:$0xff]
          %v2119 = vld [vmem:[#allocation2 + $0x18] sm:$0xff]
          %v2120 = vld [vmem:[#allocation2 + $0x20] sm:$0xff]
          %v2121 = vld [vmem:[#allocation2 + $0x28] sm:$0xff]
          %v2122 = vld [vmem:[#allocation2 + $0x30] sm:$0xff]
          %v2123 = vld [vmem:[#allocation2 + $0x38] sm:$0xff]
          %v2124 = vld [vmem:[#allocation2 + $0x40] sm:$0xff]
          %v2125 = vld [vmem:[#allocation2 + $0x48] sm:$0xff]
          %v2126 = vld [vmem:[#allocation2 + $0x50] sm:$0xff]
          %v2127 = vld [vmem:[#allocation2 + $0x58] sm:$0xff]
          %v2128 = vld [vmem:[#allocation2 + $0x60] sm:$0xff]
          %v2129 = vld [vmem:[#allocation2 + $0x68] sm:$0xff]
          %v2130 = vld [vmem:[#allocation2 + $0x70] sm:$0xff]
          %v2131 = vld [vmem:[#allocation2 + $0x78] sm:$0xff]
          %v2132 = vld [vmem:[%s4] sm:$0x1]
          %v2134 = vlaneseq
          %v2135 = vshrl.u32 %v2134, 7
          %v2136 = vsub.s32 0, %v2135
          %v2137 = vrot.slane %v2132, %v2136
          %v2139 = vadd.f32 %v2116, %v2137
          %v2140 = vadd.f32 %v2117, %v2137
          %v2141 = vadd.f32 %v2118, %v2137
          %v2142 = vadd.f32 %v2119, %v2137
          %v2143 = vadd.f32 %v2120, %v2137
          %v2144 = vadd.f32 %v2121, %v2137
          %v2145 = vadd.f32 %v2122, %v2137
          %v2146 = vadd.f32 %v2123, %v2137
          %v2147 = vadd.f32 %v2124, %v2137
          %v2148 = vadd.f32 %v2125, %v2137
          %v2149 = vadd.f32 %v2126, %v2137
          %v2150 = vadd.f32 %v2127, %v2137
          %v2151 = vadd.f32 %v2128, %v2137
          %v2152 = vadd.f32 %v2129, %v2137
          %v2153 = vadd.f32 %v2130, %v2137
          %v2154 = vadd.f32 %v2131, %v2137
          %2155 = vst.msk [vmem:[%s397] sm:$0xff] %vm500, %v2139
          %2156 = vst.msk [vmem:[%s397 + $0x8] sm:$0xff] %vm500, %v2140
          %2157 = vst.msk [vmem:[%s397 + $0x10] sm:$0xff] %vm500, %v2141
          %2158 = vst.msk [vmem:[%s397 + $0x18] sm:$0xff] %vm500, %v2142
          %2159 = vst.msk [vmem:[%s397 + $0x20] sm:$0xff] %vm500, %v2143
          %2160 = vst.msk [vmem:[%s397 + $0x28] sm:$0xff] %vm500, %v2144
          %2161 = vst.msk [vmem:[%s397 + $0x30] sm:$0xff] %vm500, %v2145
          %2162 = vst.msk [vmem:[%s397 + $0x38] sm:$0xff] %vm500, %v2146
          %2163 = vst.msk [vmem:[%s397 + $0x40] sm:$0xff] %vm500, %v2147
          %2164 = vst.msk [vmem:[%s397 + $0x48] sm:$0xff] %vm500, %v2148
          %2165 = vst.msk [vmem:[%s397 + $0x50] sm:$0xff] %vm500, %v2149
          %2166 = vst.msk [vmem:[%s397 + $0x58] sm:$0xff] %vm500, %v2150
          %2167 = vst.msk [vmem:[%s397 + $0x60] sm:$0xff] %vm500, %v2151
          %2168 = vst.msk [vmem:[%s397 + $0x68] sm:$0xff] %vm500, %v2152
          %2169 = vst.msk [vmem:[%s397 + $0x70] sm:$0xff] %vm500, %v2153
          %2170 = vst.msk [vmem:[%s397 + $0x78] sm:$0xff] %vm500, %v2154
        $region64: #{tpu_custom_call.1} parent=47 // pred_fallthru
          _
        %s2171 = smul.u32 16, %s26
        %p2172 = scmp.lt.s32.totalorder %s2171, 15
        %s2173 = scalar_select %p2172, %s2171, 15
        %s2174 = smul.addr %s2173, 8
        %s2175 = scalar_lea.vmem %s7, %s2174
        // Predicated region
        $region65: #{tpu_custom_call.1} parent=47 // pred_check
          %p2176 = pneg %p224
        $region66: #{tpu_custom_call.1} parent=47 // pred_check_branch
          %2178 = sbr.rel (%p2176) target = $region68
        $region67: #{tpu_custom_call.1} parent=47 // pred_region
          %s2179 = smul.u32 16, %s26
        $region68: #{tpu_custom_call.1} parent=47 // pred_fallthru
          _
        // Predicated region
        $region69: #{tpu_custom_call.1} parent=47 // pred_check
          %p2180 = pneg %p224
        $region70: #{tpu_custom_call.1} parent=47 // pred_check_branch
          %2182 = sbr.rel (%p2180) target = $region72
        $region71: #{tpu_custom_call.1} parent=47 // pred_region
          %s2183 = smul.u32 16, %s26
          %p2184 = scmp.lt.s32.totalorder %s2183, 15
          %s2185 = scalar_select %p2184, %s2183, 15
          %s2186 = smul.addr %s2185, 8
          %s2187 = scalar_lea.vmem %s7, %s2186
        $region72: #{tpu_custom_call.1} parent=47 // pred_fallthru
          _
      $region48: #{tpu_custom_call.1} parent=5 // pred_fallthru
        _
      %p2188 = scmp.le.s32.totalorder 2, %s17
      // Predicated region
      $region73: #{tpu_custom_call.1} parent=5 // pred_check
        %p2189 = pneg %p2188
      $region74: #{tpu_custom_call.1} parent=5 // pred_check_branch
        %2191 = sbr.rel (%p2189) target = $region76
      $region75: #{tpu_custom_call.1} parent=5 // pred_region
        %s2192 = ssub.s32 %s17, 2
      $region76: #{tpu_custom_call.1} parent=5 // pred_fallthru
        _
    $region6: #{tpu_custom_call.1} parent=1 // loop_footer
      %s21 = sadd.s32 1, %s17
    $region7: #{tpu_custom_call.1} parent=1 // loop_footer_branch
      %16 = sbr.rel target = $region3
    $region8: #{tpu_custom_call.1} parent=1 // loop_exit
      _
    %2193 = vsyncpa [#allocation4], 1
    %s2194 = scalar_lea.sflag [#allocation4], 1
    %2195 = vsyncpa %s2194, 1
    %2196 = vsyncpa [#allocation5], 1
    %s2197 = scalar_lea.sflag [#allocation5], 1
    %2198 = vsyncpa %s2197, 1

</llo_original>
